<compile_context>
chip_gen: v6e
topology: v6e:2x2x1
jax: 0.10.0
libtpu: 0.0.40
codegen_flags: <defaults>
</compile_context>

<pallas_src>
import functools

import jax
import jax.numpy as jnp
from jax.experimental import pallas as pl
from jax.experimental.pallas import tpu as pltpu


# MXU operand dtype.  bf16 operands (with f32 accumulation) cut MXU passes on
# the per-step h @ W_hh^T that sits on the serial critical path; v5e/v6e/v7x
# MXUs are all bf16-native.  Gate/state math below is kept in f32 regardless.
MATMUL_DTYPE = jnp.bfloat16


def _stacked_lstm_compute(cur, weights, *, seq_len, bl, hid_dim, matmul_dtype):
    """Stacked-LSTM forward on traced values (no scratch round trips).

    cur     : (seq_len * bl, D0) f32, time-major rows (row = t * bl + b).
    weights : list of (w_ih^T (D_l, 4H), w_hh^T (H, 4H), bias (1, 4H) f32).
    returns : (bl, seq_len * hid_dim) f32 slab with [b, t*H:(t+1)*H] == h_t[b],
              i.e. reshape(bl, seq_len, hid_dim) is the batch-first output.
    """
    S, B, H = seq_len, bl, hid_dim
    n_layers = len(weights)
    out_slab = None

    for l, (wih_t, whh_t, bias) in enumerate(weights):
        # ---- Phase 1 (off the critical path): input projection for ALL time
        #      steps in one MXU matmul; bias (b_ih + b_hh) folded in once.
        gx = jnp.dot(cur.astype(matmul_dtype), wih_t,
                     preferred_element_type=jnp.float32) + bias      # (S*B, 4H) f32

        # ---- Phase 2 (recurrent): only h_{t-1} @ W_hh^T + gate math per step.
        h = jnp.zeros((B, H), jnp.float32)
        c = jnp.zeros((B, H), jnp.float32)
        hs = []
        # S is tiny here, so a fully unrolled Python loop is fine.
        # TODO(synk): for S beyond ~16-32 switch to lax.fori_loop (small unroll)
        # or a time-chunked grid so live ranges stay within the 64 vregs; for
        # production sizes also pin W_hh^T via pltpu.matmul_push_rhs.
        for t in range(S):
            gates = gx[t * B:(t + 1) * B, :] + jnp.dot(
                h.astype(matmul_dtype), whh_t,
                preferred_element_type=jnp.float32)                  # (B, 4H) f32

            sig = jax.nn.sigmoid(gates)                # fused over the (B,4H) vreg
            i_g = sig[:, 0 * H:1 * H]                  # input gate
            f_g = sig[:, 1 * H:2 * H]                  # forget gate
            o_g = sig[:, 3 * H:4 * H]                  # output gate
            g_g = jnp.tanh(gates[:, 2 * H:3 * H])      # tanh only on the g lanes

            c = f_g * c + i_g * g_g
            h = o_g * jnp.tanh(c)
            hs.append(h)

        if l + 1 < n_layers:
            # Time-major (S*B, H) rows feed the next layer's fused projection.
            cur = jnp.concatenate(hs, axis=0)
        else:
            # Lane-dense (B, S*H) output slab -> one unmasked bulk store; the
            # wrapper reshape to (B, S, H) is free.
            out_slab = jnp.concatenate(hs, axis=1)

    return out_slab


def _fused_kernel(*refs, layer_num, seq_len, batch, hid_dim, matmul_dtype):
    """Gridless fused kernel: whole stacked RNN in one invocation (v5e/v6e).

    refs: x_tm (S*B, E) | per layer: W_ih^T, W_hh^T, bias | out (B, S*H)
    """
    x_ref = refs[0]
    out_ref = refs[1 + 3 * layer_num]
    weights = [(refs[1 + 3 * l][...], refs[2 + 3 * l][...], refs[3 + 3 * l][...])
               for l in range(layer_num)]
    y = _stacked_lstm_compute(x_ref[...], weights, seq_len=seq_len, bl=batch,
                              hid_dim=hid_dim, matmul_dtype=matmul_dtype)
    out_ref[...] = y.astype(out_ref.dtype)


def _per_batch_kernel(*refs, layer_num, seq_len, hid_dim, matmul_dtype):
    """grid=(B,) kernel: one batch element per program (v7x: 2 TensorCores).

    refs: x block (1, S, E) | per layer: W_ih^T, W_hh^T, bias | out block (1, 1, S*H)
    """
    x_ref = refs[0]
    out_ref = refs[1 + 3 * layer_num]
    weights = [(refs[1 + 3 * l][...], refs[2 + 3 * l][...], refs[3 + 3 * l][...])
               for l in range(layer_num)]
    cur = x_ref[0]                       # (S, E): already time-major when bl == 1
    y = _stacked_lstm_compute(cur, weights, seq_len=seq_len, bl=1,
                              hid_dim=hid_dim, matmul_dtype=matmul_dtype)
    out_ref[0] = y.astype(out_ref.dtype)


def basic_rnn_forward(x_bse, params, *, matmul_dtype=MATMUL_DTYPE,
                      batch_parallel=False):
    """BasicRNN forward (stacked LSTMs, zero initial state).

    x_bse  : (batch, seq, emb_dim) float32, batch_first like nn.LSTM(batch_first=True).
    params : list of (w_ih (4H, D), w_hh (4H, H), b_ih (4H,), b_hh (4H,)) per
             layer, PyTorch gate order (i, f, g, o).
    batch_parallel : use grid=(B,) + dimension_semantics=("parallel",) so a
             multi-TensorCore chip (v7x) can split the batch across cores;
             keep False on v5e/v6e (single TC) to avoid per-grid-step overhead.
    returns (batch, seq, hid_dim) float32 — output of the last stacked layer.
    """
    B, S, E = x_bse.shape
    layer_num = len(params)
    H = params[0][1].shape[1]                            # w_hh: (4H, H)

    flat_w = []
    for (w_ih, w_hh, b_ih, b_hh) in params:
        flat_w.append(jnp.asarray(w_ih.T, matmul_dtype))                 # (D, 4H)
        flat_w.append(jnp.asarray(w_hh.T, matmul_dtype))                 # (H, 4H)
        flat_w.append(jnp.asarray((b_ih + b_hh)[None, :], jnp.float32))  # (1, 4H)

    # TODO(synk): at production sizes the hoisted (S*B, 4H) gate buffer must be
    # time-tiled with a grid + BlockSpec pipeline (smaller chunks on v7x's
    # 64 MiB VMEM, raise vmem_limit_bytes as needed); fine at these toy shapes.

    if not batch_parallel:
        # One tiny fused XLA transpose (~1 KiB) produces time-major rows; all
        # further layout work happens on traced values inside the kernel.
        x_tm = jnp.transpose(x_bse.astype(jnp.float32), (1, 0, 2)).reshape(S * B, E)
        kernel = functools.partial(
            _fused_kernel, layer_num=layer_num, seq_len=S, batch=B,
            hid_dim=H, matmul_dtype=matmul_dtype)
        vmem = pl.BlockSpec(memory_space=pltpu.MemorySpace.VMEM)
        y = pl.pallas_call(
            kernel,
            out_shape=jax.ShapeDtypeStruct((B, S * H), jnp.float32),
            in_specs=[vmem] * (1 + len(flat_w)),
            out_specs=vmem,
        )(x_tm, *flat_w)
        return y.reshape(B, S, H)

    # ---- batch-parallel path (v7x): one program per batch element ----------
    x3 = x_bse.astype(jnp.float32)
    kernel = functools.partial(
        _per_batch_kernel, layer_num=layer_num, seq_len=S,
        hid_dim=H, matmul_dtype=matmul_dtype)
    in_specs = [pl.BlockSpec((1, S, E), lambda b: (b, 0, 0))]
    in_specs += [pl.BlockSpec(w.shape, lambda b: (0, 0)) for w in flat_w]
    y = pl.pallas_call(
        kernel,
        out_shape=jax.ShapeDtypeStruct((B, 1, S * H), jnp.float32),
        grid=(B,),
        in_specs=in_specs,
        out_specs=pl.BlockSpec((1, 1, S * H), lambda b: (b, 0, 0)),
        compiler_params=pltpu.CompilerParams(
            dimension_semantics=("parallel",)),
    )(x3, *flat_w)
    return y.reshape(B, S, H)


def init_basic_rnn_params(key, layer_num, emb_dim, hid_dim):
    """Deterministic params mimicking nn.LSTM's uniform(-1/sqrt(H), 1/sqrt(H)) init."""
    params = []
    bound = 1.0 / float(jnp.sqrt(jnp.float32(hid_dim)))
    in_dim = emb_dim
    for _ in range(layer_num):
        key, k1, k2, k3, k4 = jax.random.split(key, 5)
        w_ih = jax.random.uniform(k1, (4 * hid_dim, in_dim), jnp.float32, -bound, bound)
        w_hh = jax.random.uniform(k2, (4 * hid_dim, hid_dim), jnp.float32, -bound, bound)
        b_ih = jax.random.uniform(k3, (4 * hid_dim,), jnp.float32, -bound, bound)
        b_hh = jax.random.uniform(k4, (4 * hid_dim,), jnp.float32, -bound, bound)
        params.append((w_ih, w_hh, b_ih, b_hh))
        in_dim = hid_dim
    return params


def _lstm_reference(x_bse, params):
    """Pure-JAX stacked-LSTM reference (zero initial state), for self-checking."""
    h_seq = x_bse.astype(jnp.float32)
    B = h_seq.shape[0]
    for (w_ih, w_hh, b_ih, b_hh) in params:
        H = w_hh.shape[1]
        bias = b_ih + b_hh

        def step(carry, x_t, w_ih=w_ih, w_hh=w_hh, bias=bias, H=H):
            h, c = carry
            gates = x_t @ w_ih.T + h @ w_hh.T + bias
            i = jax.nn.sigmoid(gates[:, 0 * H:1 * H])
            f = jax.nn.sigmoid(gates[:, 1 * H:2 * H])
            g = jnp.tanh(gates[:, 2 * H:3 * H])
            o = jax.nn.sigmoid(gates[:, 3 * H:4 * H])
            c = f * c + i * g
            h = o * jnp.tanh(c)
            return (h, c), h

        h0 = jnp.zeros((B, H), jnp.float32)
        c0 = jnp.zeros((B, H), jnp.float32)
        xs = jnp.transpose(h_seq, (1, 0, 2))             # (S, B, D)
        _, ys = jax.lax.scan(step, (h0, c0), xs)         # (S, B, H)
        h_seq = jnp.transpose(ys, (1, 0, 2))             # (B, S, H)
    return h_seq


if __name__ == "__main__":
    # Small shapes consistent with the module: layer_num=2, unit='lstm',
    # emb_dim=16, hid_dim=32, batch=2, seq=8.
    LAYER_NUM, EMB_DIM, HID_DIM = 2, 16, 32
    BATCH, SEQ = 2, 8

    key = jax.random.PRNGKey(0)
    key_x, key_p = jax.random.split(key)

    x = jax.random.normal(key_x, (BATCH, SEQ, EMB_DIM), jnp.float32)
    params = init_basic_rnn_params(key_p, LAYER_NUM, EMB_DIM, HID_DIM)

    ref = jax.block_until_ready(_lstm_reference(x, params))
    tol = 2e-3 if MATMUL_DTYPE == jnp.float32 else 5e-2   # bf16 MXU operands

    # Default fused (gridless) path — best for v5e / v6e (single TensorCore).
    fwd = jax.jit(functools.partial(basic_rnn_forward, batch_parallel=False))
    out = jax.block_until_ready(fwd(x, params))
    assert out.shape == (BATCH, SEQ, HID_DIM), out.shape
    assert out.dtype == jnp.float32
    err = float(jnp.max(jnp.abs(out - ref)))
    assert err < tol, f"fused kernel mismatch vs reference LSTM: max abs err = {err}"

    # Batch-parallel path — lets v7x's second TensorCore take half the batch.
    fwd_bp = jax.jit(functools.partial(basic_rnn_forward, batch_parallel=True))
    out_bp = jax.block_until_ready(fwd_bp(x, params))
    assert out_bp.shape == (BATCH, SEQ, HID_DIM), out_bp.shape
    err_bp = float(jnp.max(jnp.abs(out_bp - ref)))
    assert err_bp < tol, f"batch-parallel kernel mismatch: max abs err = {err_bp}"

    print("KERNEL_OK")
</pallas_src>

<mosaic_0001>
module attributes {stable_mosaic.version = 11 : i64} {
  func.func @_fused_kernel(%arg0: memref<16x16xf32, #tpu.memory_space<vmem>>, %arg1: memref<16x128xbf16, #tpu.memory_space<vmem>>, %arg2: memref<32x128xbf16, #tpu.memory_space<vmem>>, %arg3: memref<1x128xf32, #tpu.memory_space<vmem>>, %arg4: memref<32x128xbf16, #tpu.memory_space<vmem>>, %arg5: memref<32x128xbf16, #tpu.memory_space<vmem>>, %arg6: memref<1x128xf32, #tpu.memory_space<vmem>>, %arg7: memref<2x256xf32, #tpu.memory_space<vmem>>) attributes {dimension_semantics = [], scalar_prefetch = 0 : i64, scratch_operands = 0 : i64, tpu.core_type = #tpu.core_type<tc>} {
    %c0 = arith.constant 0 : index
    %c0_0 = arith.constant 0 : index
    %0 = vector.load %arg1[%c0, %c0_0] : memref<16x128xbf16, #tpu.memory_space<vmem>>, vector<16x128xbf16>
    %c0_1 = arith.constant 0 : index
    %c0_2 = arith.constant 0 : index
    %1 = vector.load %arg2[%c0_1, %c0_2] : memref<32x128xbf16, #tpu.memory_space<vmem>>, vector<32x128xbf16>
    %c0_3 = arith.constant 0 : index
    %c0_4 = arith.constant 0 : index
    %2 = vector.load %arg3[%c0_3, %c0_4] : memref<1x128xf32, #tpu.memory_space<vmem>>, vector<1x128xf32>
    %c0_5 = arith.constant 0 : index
    %c0_6 = arith.constant 0 : index
    %3 = vector.load %arg4[%c0_5, %c0_6] : memref<32x128xbf16, #tpu.memory_space<vmem>>, vector<32x128xbf16>
    %c0_7 = arith.constant 0 : index
    %c0_8 = arith.constant 0 : index
    %4 = vector.load %arg5[%c0_7, %c0_8] : memref<32x128xbf16, #tpu.memory_space<vmem>>, vector<32x128xbf16>
    %c0_9 = arith.constant 0 : index
    %c0_10 = arith.constant 0 : index
    %5 = vector.load %arg6[%c0_9, %c0_10] : memref<1x128xf32, #tpu.memory_space<vmem>>, vector<1x128xf32>
    %c0_11 = arith.constant 0 : index
    %c0_12 = arith.constant 0 : index
    %6 = vector.load %arg0[%c0_11, %c0_12] : memref<16x16xf32, #tpu.memory_space<vmem>>, vector<16x16xf32>
    %7 = arith.truncf %6 : vector<16x16xf32> to vector<16x16xbf16>
    %cst = arith.constant dense<0.000000e+00> : vector<16x128xf32>
    %8 = tpu.matmul %7, %0, %cst {dimension_numbers = #tpu.dot_dimension_numbers<[1], [0], [0], [1], [0, 0, 1, 1], [], []>} : vector<16x16xbf16>, vector<16x128xbf16>, vector<16x128xf32> -> vector<16x128xf32>
    %9 = vector.broadcast %2 : vector<1x128xf32> to vector<16x128xf32>
    %10 = arith.addf %8, %9 : vector<16x128xf32>
    %cst_13 = arith.constant 0.000000e+00 : f32
    %11 = vector.broadcast %cst_13 : f32 to vector<2x32xf32>
    %cst_14 = arith.constant 0.000000e+00 : f32
    %12 = vector.broadcast %cst_14 : f32 to vector<2x32xf32>
    %13 = vector.extract_strided_slice %10 {offsets = [0, 0], sizes = [2, 128], strides = [1, 1]} : vector<16x128xf32> to vector<2x128xf32>
    %14 = arith.truncf %11 : vector<2x32xf32> to vector<2x32xbf16>
    %cst_15 = arith.constant dense<0.000000e+00> : vector<2x128xf32>
    %15 = tpu.matmul %14, %1, %cst_15 {dimension_numbers = #tpu.dot_dimension_numbers<[1], [0], [0], [1], [0, 0, 1, 1], [], []>} : vector<2x32xbf16>, vector<32x128xbf16>, vector<2x128xf32> -> vector<2x128xf32>
    %16 = arith.addf %13, %15 : vector<2x128xf32>
    %17 = arith.negf %16 : vector<2x128xf32>
    %18 = math.exp %17 : vector<2x128xf32>
    %cst_16 = arith.constant 1.000000e+00 : f32
    %19 = vector.broadcast %cst_16 : f32 to vector<2x128xf32>
    %20 = arith.addf %19, %18 : vector<2x128xf32>
    %21 = arith.divf %19, %20 : vector<2x128xf32>
    %22 = vector.extract_strided_slice %21 {offsets = [0, 0], sizes = [2, 32], strides = [1, 1]} : vector<2x128xf32> to vector<2x32xf32>
    %23 = vector.extract_strided_slice %21 {offsets = [0, 32], sizes = [2, 32], strides = [1, 1]} : vector<2x128xf32> to vector<2x32xf32>
    %24 = vector.extract_strided_slice %21 {offsets = [0, 96], sizes = [2, 32], strides = [1, 1]} : vector<2x128xf32> to vector<2x32xf32>
    %25 = vector.extract_strided_slice %16 {offsets = [0, 64], sizes = [2, 32], strides = [1, 1]} : vector<2x128xf32> to vector<2x32xf32>
    %26 = math.tanh %25 : vector<2x32xf32>
    %27 = arith.mulf %23, %12 : vector<2x32xf32>
    %28 = arith.mulf %22, %26 : vector<2x32xf32>
    %29 = arith.addf %27, %28 : vector<2x32xf32>
    %30 = math.tanh %29 : vector<2x32xf32>
    %31 = arith.mulf %24, %30 : vector<2x32xf32>
    %32 = vector.extract_strided_slice %10 {offsets = [2, 0], sizes = [2, 128], strides = [1, 1]} : vector<16x128xf32> to vector<2x128xf32>
    %33 = arith.truncf %31 : vector<2x32xf32> to vector<2x32xbf16>
    %cst_17 = arith.constant dense<0.000000e+00> : vector<2x128xf32>
    %34 = tpu.matmul %33, %1, %cst_17 {dimension_numbers = #tpu.dot_dimension_numbers<[1], [0], [0], [1], [0, 0, 1, 1], [], []>} : vector<2x32xbf16>, vector<32x128xbf16>, vector<2x128xf32> -> vector<2x128xf32>
    %35 = arith.addf %32, %34 : vector<2x128xf32>
    %36 = arith.negf %35 : vector<2x128xf32>
    %37 = math.exp %36 : vector<2x128xf32>
    %cst_18 = arith.constant 1.000000e+00 : f32
    %38 = vector.broadcast %cst_18 : f32 to vector<2x128xf32>
    %39 = arith.addf %38, %37 : vector<2x128xf32>
    %40 = arith.divf %38, %39 : vector<2x128xf32>
    %41 = vector.extract_strided_slice %40 {offsets = [0, 0], sizes = [2, 32], strides = [1, 1]} : vector<2x128xf32> to vector<2x32xf32>
    %42 = vector.extract_strided_slice %40 {offsets = [0, 32], sizes = [2, 32], strides = [1, 1]} : vector<2x128xf32> to vector<2x32xf32>
    %43 = vector.extract_strided_slice %40 {offsets = [0, 96], sizes = [2, 32], strides = [1, 1]} : vector<2x128xf32> to vector<2x32xf32>
    %44 = vector.extract_strided_slice %35 {offsets = [0, 64], sizes = [2, 32], strides = [1, 1]} : vector<2x128xf32> to vector<2x32xf32>
    %45 = math.tanh %44 : vector<2x32xf32>
    %46 = arith.mulf %42, %29 : vector<2x32xf32>
    %47 = arith.mulf %41, %45 : vector<2x32xf32>
    %48 = arith.addf %46, %47 : vector<2x32xf32>
    %49 = math.tanh %48 : vector<2x32xf32>
    %50 = arith.mulf %43, %49 : vector<2x32xf32>
    %51 = vector.extract_strided_slice %10 {offsets = [4, 0], sizes = [2, 128], strides = [1, 1]} : vector<16x128xf32> to vector<2x128xf32>
    %52 = arith.truncf %50 : vector<2x32xf32> to vector<2x32xbf16>
    %cst_19 = arith.constant dense<0.000000e+00> : vector<2x128xf32>
    %53 = tpu.matmul %52, %1, %cst_19 {dimension_numbers = #tpu.dot_dimension_numbers<[1], [0], [0], [1], [0, 0, 1, 1], [], []>} : vector<2x32xbf16>, vector<32x128xbf16>, vector<2x128xf32> -> vector<2x128xf32>
    %54 = arith.addf %51, %53 : vector<2x128xf32>
    %55 = arith.negf %54 : vector<2x128xf32>
    %56 = math.exp %55 : vector<2x128xf32>
    %cst_20 = arith.constant 1.000000e+00 : f32
    %57 = vector.broadcast %cst_20 : f32 to vector<2x128xf32>
    %58 = arith.addf %57, %56 : vector<2x128xf32>
    %59 = arith.divf %57, %58 : vector<2x128xf32>
    %60 = vector.extract_strided_slice %59 {offsets = [0, 0], sizes = [2, 32], strides = [1, 1]} : vector<2x128xf32> to vector<2x32xf32>
    %61 = vector.extract_strided_slice %59 {offsets = [0, 32], sizes = [2, 32], strides = [1, 1]} : vector<2x128xf32> to vector<2x32xf32>
    %62 = vector.extract_strided_slice %59 {offsets = [0, 96], sizes = [2, 32], strides = [1, 1]} : vector<2x128xf32> to vector<2x32xf32>
    %63 = vector.extract_strided_slice %54 {offsets = [0, 64], sizes = [2, 32], strides = [1, 1]} : vector<2x128xf32> to vector<2x32xf32>
    %64 = math.tanh %63 : vector<2x32xf32>
    %65 = arith.mulf %61, %48 : vector<2x32xf32>
    %66 = arith.mulf %60, %64 : vector<2x32xf32>
    %67 = arith.addf %65, %66 : vector<2x32xf32>
    %68 = math.tanh %67 : vector<2x32xf32>
    %69 = arith.mulf %62, %68 : vector<2x32xf32>
    %70 = vector.extract_strided_slice %10 {offsets = [6, 0], sizes = [2, 128], strides = [1, 1]} : vector<16x128xf32> to vector<2x128xf32>
    %71 = arith.truncf %69 : vector<2x32xf32> to vector<2x32xbf16>
    %cst_21 = arith.constant dense<0.000000e+00> : vector<2x128xf32>
    %72 = tpu.matmul %71, %1, %cst_21 {dimension_numbers = #tpu.dot_dimension_numbers<[1], [0], [0], [1], [0, 0, 1, 1], [], []>} : vector<2x32xbf16>, vector<32x128xbf16>, vector<2x128xf32> -> vector<2x128xf32>
    %73 = arith.addf %70, %72 : vector<2x128xf32>
    %74 = arith.negf %73 : vector<2x128xf32>
    %75 = math.exp %74 : vector<2x128xf32>
    %cst_22 = arith.constant 1.000000e+00 : f32
    %76 = vector.broadcast %cst_22 : f32 to vector<2x128xf32>
    %77 = arith.addf %76, %75 : vector<2x128xf32>
    %78 = arith.divf %76, %77 : vector<2x128xf32>
    %79 = vector.extract_strided_slice %78 {offsets = [0, 0], sizes = [2, 32], strides = [1, 1]} : vector<2x128xf32> to vector<2x32xf32>
    %80 = vector.extract_strided_slice %78 {offsets = [0, 32], sizes = [2, 32], strides = [1, 1]} : vector<2x128xf32> to vector<2x32xf32>
    %81 = vector.extract_strided_slice %78 {offsets = [0, 96], sizes = [2, 32], strides = [1, 1]} : vector<2x128xf32> to vector<2x32xf32>
    %82 = vector.extract_strided_slice %73 {offsets = [0, 64], sizes = [2, 32], strides = [1, 1]} : vector<2x128xf32> to vector<2x32xf32>
    %83 = math.tanh %82 : vector<2x32xf32>
    %84 = arith.mulf %80, %67 : vector<2x32xf32>
    %85 = arith.mulf %79, %83 : vector<2x32xf32>
    %86 = arith.addf %84, %85 : vector<2x32xf32>
    %87 = math.tanh %86 : vector<2x32xf32>
    %88 = arith.mulf %81, %87 : vector<2x32xf32>
    %89 = vector.extract_strided_slice %10 {offsets = [8, 0], sizes = [2, 128], strides = [1, 1]} : vector<16x128xf32> to vector<2x128xf32>
    %90 = arith.truncf %88 : vector<2x32xf32> to vector<2x32xbf16>
    %cst_23 = arith.constant dense<0.000000e+00> : vector<2x128xf32>
    %91 = tpu.matmul %90, %1, %cst_23 {dimension_numbers = #tpu.dot_dimension_numbers<[1], [0], [0], [1], [0, 0, 1, 1], [], []>} : vector<2x32xbf16>, vector<32x128xbf16>, vector<2x128xf32> -> vector<2x128xf32>
    %92 = arith.addf %89, %91 : vector<2x128xf32>
    %93 = arith.negf %92 : vector<2x128xf32>
    %94 = math.exp %93 : vector<2x128xf32>
    %cst_24 = arith.constant 1.000000e+00 : f32
    %95 = vector.broadcast %cst_24 : f32 to vector<2x128xf32>
    %96 = arith.addf %95, %94 : vector<2x128xf32>
    %97 = arith.divf %95, %96 : vector<2x128xf32>
    %98 = vector.extract_strided_slice %97 {offsets = [0, 0], sizes = [2, 32], strides = [1, 1]} : vector<2x128xf32> to vector<2x32xf32>
    %99 = vector.extract_strided_slice %97 {offsets = [0, 32], sizes = [2, 32], strides = [1, 1]} : vector<2x128xf32> to vector<2x32xf32>
    %100 = vector.extract_strided_slice %97 {offsets = [0, 96], sizes = [2, 32], strides = [1, 1]} : vector<2x128xf32> to vector<2x32xf32>
    %101 = vector.extract_strided_slice %92 {offsets = [0, 64], sizes = [2, 32], strides = [1, 1]} : vector<2x128xf32> to vector<2x32xf32>
    %102 = math.tanh %101 : vector<2x32xf32>
    %103 = arith.mulf %99, %86 : vector<2x32xf32>
    %104 = arith.mulf %98, %102 : vector<2x32xf32>
    %105 = arith.addf %103, %104 : vector<2x32xf32>
    %106 = math.tanh %105 : vector<2x32xf32>
    %107 = arith.mulf %100, %106 : vector<2x32xf32>
    %108 = vector.extract_strided_slice %10 {offsets = [10, 0], sizes = [2, 128], strides = [1, 1]} : vector<16x128xf32> to vector<2x128xf32>
    %109 = arith.truncf %107 : vector<2x32xf32> to vector<2x32xbf16>
    %cst_25 = arith.constant dense<0.000000e+00> : vector<2x128xf32>
    %110 = tpu.matmul %109, %1, %cst_25 {dimension_numbers = #tpu.dot_dimension_numbers<[1], [0], [0], [1], [0, 0, 1, 1], [], []>} : vector<2x32xbf16>, vector<32x128xbf16>, vector<2x128xf32> -> vector<2x128xf32>
    %111 = arith.addf %108, %110 : vector<2x128xf32>
    %112 = arith.negf %111 : vector<2x128xf32>
    %113 = math.exp %112 : vector<2x128xf32>
    %cst_26 = arith.constant 1.000000e+00 : f32
    %114 = vector.broadcast %cst_26 : f32 to vector<2x128xf32>
    %115 = arith.addf %114, %113 : vector<2x128xf32>
    %116 = arith.divf %114, %115 : vector<2x128xf32>
    %117 = vector.extract_strided_slice %116 {offsets = [0, 0], sizes = [2, 32], strides = [1, 1]} : vector<2x128xf32> to vector<2x32xf32>
    %118 = vector.extract_strided_slice %116 {offsets = [0, 32], sizes = [2, 32], strides = [1, 1]} : vector<2x128xf32> to vector<2x32xf32>
    %119 = vector.extract_strided_slice %116 {offsets = [0, 96], sizes = [2, 32], strides = [1, 1]} : vector<2x128xf32> to vector<2x32xf32>
    %120 = vector.extract_strided_slice %111 {offsets = [0, 64], sizes = [2, 32], strides = [1, 1]} : vector<2x128xf32> to vector<2x32xf32>
    %121 = math.tanh %120 : vector<2x32xf32>
    %122 = arith.mulf %118, %105 : vector<2x32xf32>
    %123 = arith.mulf %117, %121 : vector<2x32xf32>
    %124 = arith.addf %122, %123 : vector<2x32xf32>
    %125 = math.tanh %124 : vector<2x32xf32>
    %126 = arith.mulf %119, %125 : vector<2x32xf32>
    %127 = vector.extract_strided_slice %10 {offsets = [12, 0], sizes = [2, 128], strides = [1, 1]} : vector<16x128xf32> to vector<2x128xf32>
    %128 = arith.truncf %126 : vector<2x32xf32> to vector<2x32xbf16>
    %cst_27 = arith.constant dense<0.000000e+00> : vector<2x128xf32>
    %129 = tpu.matmul %128, %1, %cst_27 {dimension_numbers = #tpu.dot_dimension_numbers<[1], [0], [0], [1], [0, 0, 1, 1], [], []>} : vector<2x32xbf16>, vector<32x128xbf16>, vector<2x128xf32> -> vector<2x128xf32>
    %130 = arith.addf %127, %129 : vector<2x128xf32>
    %131 = arith.negf %130 : vector<2x128xf32>
    %132 = math.exp %131 : vector<2x128xf32>
    %cst_28 = arith.constant 1.000000e+00 : f32
    %133 = vector.broadcast %cst_28 : f32 to vector<2x128xf32>
    %134 = arith.addf %133, %132 : vector<2x128xf32>
    %135 = arith.divf %133, %134 : vector<2x128xf32>
    %136 = vector.extract_strided_slice %135 {offsets = [0, 0], sizes = [2, 32], strides = [1, 1]} : vector<2x128xf32> to vector<2x32xf32>
    %137 = vector.extract_strided_slice %135 {offsets = [0, 32], sizes = [2, 32], strides = [1, 1]} : vector<2x128xf32> to vector<2x32xf32>
    %138 = vector.extract_strided_slice %135 {offsets = [0, 96], sizes = [2, 32], strides = [1, 1]} : vector<2x128xf32> to vector<2x32xf32>
    %139 = vector.extract_strided_slice %130 {offsets = [0, 64], sizes = [2, 32], strides = [1, 1]} : vector<2x128xf32> to vector<2x32xf32>
    %140 = math.tanh %139 : vector<2x32xf32>
    %141 = arith.mulf %137, %124 : vector<2x32xf32>
    %142 = arith.mulf %136, %140 : vector<2x32xf32>
    %143 = arith.addf %141, %142 : vector<2x32xf32>
    %144 = math.tanh %143 : vector<2x32xf32>
    %145 = arith.mulf %138, %144 : vector<2x32xf32>
    %146 = vector.extract_strided_slice %10 {offsets = [14, 0], sizes = [2, 128], strides = [1, 1]} : vector<16x128xf32> to vector<2x128xf32>
    %147 = arith.truncf %145 : vector<2x32xf32> to vector<2x32xbf16>
    %cst_29 = arith.constant dense<0.000000e+00> : vector<2x128xf32>
    %148 = tpu.matmul %147, %1, %cst_29 {dimension_numbers = #tpu.dot_dimension_numbers<[1], [0], [0], [1], [0, 0, 1, 1], [], []>} : vector<2x32xbf16>, vector<32x128xbf16>, vector<2x128xf32> -> vector<2x128xf32>
    %149 = arith.addf %146, %148 : vector<2x128xf32>
    %150 = arith.negf %149 : vector<2x128xf32>
    %151 = math.exp %150 : vector<2x128xf32>
    %cst_30 = arith.constant 1.000000e+00 : f32
    %152 = vector.broadcast %cst_30 : f32 to vector<2x128xf32>
    %153 = arith.addf %152, %151 : vector<2x128xf32>
    %154 = arith.divf %152, %153 : vector<2x128xf32>
    %155 = vector.extract_strided_slice %154 {offsets = [0, 0], sizes = [2, 32], strides = [1, 1]} : vector<2x128xf32> to vector<2x32xf32>
    %156 = vector.extract_strided_slice %154 {offsets = [0, 32], sizes = [2, 32], strides = [1, 1]} : vector<2x128xf32> to vector<2x32xf32>
    %157 = vector.extract_strided_slice %154 {offsets = [0, 96], sizes = [2, 32], strides = [1, 1]} : vector<2x128xf32> to vector<2x32xf32>
    %158 = vector.extract_strided_slice %149 {offsets = [0, 64], sizes = [2, 32], strides = [1, 1]} : vector<2x128xf32> to vector<2x32xf32>
    %159 = math.tanh %158 : vector<2x32xf32>
    %160 = arith.mulf %156, %143 : vector<2x32xf32>
    %161 = arith.mulf %155, %159 : vector<2x32xf32>
    %162 = arith.addf %160, %161 : vector<2x32xf32>
    %163 = math.tanh %162 : vector<2x32xf32>
    %164 = arith.mulf %157, %163 : vector<2x32xf32>
    %165 = tpu.concatenate %31, %50, %69, %88, %107, %126, %145, %164 in 0 : vector<2x32xf32>, vector<2x32xf32>, vector<2x32xf32>, vector<2x32xf32>, vector<2x32xf32>, vector<2x32xf32>, vector<2x32xf32>, vector<2x32xf32> -> vector<16x32xf32>
    %166 = arith.truncf %165 : vector<16x32xf32> to vector<16x32xbf16>
    %cst_31 = arith.constant dense<0.000000e+00> : vector<16x128xf32>
    %167 = tpu.matmul %166, %3, %cst_31 {dimension_numbers = #tpu.dot_dimension_numbers<[1], [0], [0], [1], [0, 0, 1, 1], [], []>} : vector<16x32xbf16>, vector<32x128xbf16>, vector<16x128xf32> -> vector<16x128xf32>
    %168 = vector.broadcast %5 : vector<1x128xf32> to vector<16x128xf32>
    %169 = arith.addf %167, %168 : vector<16x128xf32>
    %cst_32 = arith.constant 0.000000e+00 : f32
    %170 = vector.broadcast %cst_32 : f32 to vector<2x32xf32>
    %cst_33 = arith.constant 0.000000e+00 : f32
    %171 = vector.broadcast %cst_33 : f32 to vector<2x32xf32>
    %172 = vector.extract_strided_slice %169 {offsets = [0, 0], sizes = [2, 128], strides = [1, 1]} : vector<16x128xf32> to vector<2x128xf32>
    %173 = arith.truncf %170 : vector<2x32xf32> to vector<2x32xbf16>
    %cst_34 = arith.constant dense<0.000000e+00> : vector<2x128xf32>
    %174 = tpu.matmul %173, %4, %cst_34 {dimension_numbers = #tpu.dot_dimension_numbers<[1], [0], [0], [1], [0, 0, 1, 1], [], []>} : vector<2x32xbf16>, vector<32x128xbf16>, vector<2x128xf32> -> vector<2x128xf32>
    %175 = arith.addf %172, %174 : vector<2x128xf32>
    %176 = arith.negf %175 : vector<2x128xf32>
    %177 = math.exp %176 : vector<2x128xf32>
    %cst_35 = arith.constant 1.000000e+00 : f32
    %178 = vector.broadcast %cst_35 : f32 to vector<2x128xf32>
    %179 = arith.addf %178, %177 : vector<2x128xf32>
    %180 = arith.divf %178, %179 : vector<2x128xf32>
    %181 = vector.extract_strided_slice %180 {offsets = [0, 0], sizes = [2, 32], strides = [1, 1]} : vector<2x128xf32> to vector<2x32xf32>
    %182 = vector.extract_strided_slice %180 {offsets = [0, 32], sizes = [2, 32], strides = [1, 1]} : vector<2x128xf32> to vector<2x32xf32>
    %183 = vector.extract_strided_slice %180 {offsets = [0, 96], sizes = [2, 32], strides = [1, 1]} : vector<2x128xf32> to vector<2x32xf32>
    %184 = vector.extract_strided_slice %175 {offsets = [0, 64], sizes = [2, 32], strides = [1, 1]} : vector<2x128xf32> to vector<2x32xf32>
    %185 = math.tanh %184 : vector<2x32xf32>
    %186 = arith.mulf %182, %171 : vector<2x32xf32>
    %187 = arith.mulf %181, %185 : vector<2x32xf32>
    %188 = arith.addf %186, %187 : vector<2x32xf32>
    %189 = math.tanh %188 : vector<2x32xf32>
    %190 = arith.mulf %183, %189 : vector<2x32xf32>
    %191 = vector.extract_strided_slice %169 {offsets = [2, 0], sizes = [2, 128], strides = [1, 1]} : vector<16x128xf32> to vector<2x128xf32>
    %192 = arith.truncf %190 : vector<2x32xf32> to vector<2x32xbf16>
    %cst_36 = arith.constant dense<0.000000e+00> : vector<2x128xf32>
    %193 = tpu.matmul %192, %4, %cst_36 {dimension_numbers = #tpu.dot_dimension_numbers<[1], [0], [0], [1], [0, 0, 1, 1], [], []>} : vector<2x32xbf16>, vector<32x128xbf16>, vector<2x128xf32> -> vector<2x128xf32>
    %194 = arith.addf %191, %193 : vector<2x128xf32>
    %195 = arith.negf %194 : vector<2x128xf32>
    %196 = math.exp %195 : vector<2x128xf32>
    %cst_37 = arith.constant 1.000000e+00 : f32
    %197 = vector.broadcast %cst_37 : f32 to vector<2x128xf32>
    %198 = arith.addf %197, %196 : vector<2x128xf32>
    %199 = arith.divf %197, %198 : vector<2x128xf32>
    %200 = vector.extract_strided_slice %199 {offsets = [0, 0], sizes = [2, 32], strides = [1, 1]} : vector<2x128xf32> to vector<2x32xf32>
    %201 = vector.extract_strided_slice %199 {offsets = [0, 32], sizes = [2, 32], strides = [1, 1]} : vector<2x128xf32> to vector<2x32xf32>
    %202 = vector.extract_strided_slice %199 {offsets = [0, 96], sizes = [2, 32], strides = [1, 1]} : vector<2x128xf32> to vector<2x32xf32>
    %203 = vector.extract_strided_slice %194 {offsets = [0, 64], sizes = [2, 32], strides = [1, 1]} : vector<2x128xf32> to vector<2x32xf32>
    %204 = math.tanh %203 : vector<2x32xf32>
    %205 = arith.mulf %201, %188 : vector<2x32xf32>
    %206 = arith.mulf %200, %204 : vector<2x32xf32>
    %207 = arith.addf %205, %206 : vector<2x32xf32>
    %208 = math.tanh %207 : vector<2x32xf32>
    %209 = arith.mulf %202, %208 : vector<2x32xf32>
    %210 = vector.extract_strided_slice %169 {offsets = [4, 0], sizes = [2, 128], strides = [1, 1]} : vector<16x128xf32> to vector<2x128xf32>
    %211 = arith.truncf %209 : vector<2x32xf32> to vector<2x32xbf16>
    %cst_38 = arith.constant dense<0.000000e+00> : vector<2x128xf32>
    %212 = tpu.matmul %211, %4, %cst_38 {dimension_numbers = #tpu.dot_dimension_numbers<[1], [0], [0], [1], [0, 0, 1, 1], [], []>} : vector<2x32xbf16>, vector<32x128xbf16>, vector<2x128xf32> -> vector<2x128xf32>
    %213 = arith.addf %210, %212 : vector<2x128xf32>
    %214 = arith.negf %213 : vector<2x128xf32>
    %215 = math.exp %214 : vector<2x128xf32>
    %cst_39 = arith.constant 1.000000e+00 : f32
    %216 = vector.broadcast %cst_39 : f32 to vector<2x128xf32>
    %217 = arith.addf %216, %215 : vector<2x128xf32>
    %218 = arith.divf %216, %217 : vector<2x128xf32>
    %219 = vector.extract_strided_slice %218 {offsets = [0, 0], sizes = [2, 32], strides = [1, 1]} : vector<2x128xf32> to vector<2x32xf32>
    %220 = vector.extract_strided_slice %218 {offsets = [0, 32], sizes = [2, 32], strides = [1, 1]} : vector<2x128xf32> to vector<2x32xf32>
    %221 = vector.extract_strided_slice %218 {offsets = [0, 96], sizes = [2, 32], strides = [1, 1]} : vector<2x128xf32> to vector<2x32xf32>
    %222 = vector.extract_strided_slice %213 {offsets = [0, 64], sizes = [2, 32], strides = [1, 1]} : vector<2x128xf32> to vector<2x32xf32>
    %223 = math.tanh %222 : vector<2x32xf32>
    %224 = arith.mulf %220, %207 : vector<2x32xf32>
    %225 = arith.mulf %219, %223 : vector<2x32xf32>
    %226 = arith.addf %224, %225 : vector<2x32xf32>
    %227 = math.tanh %226 : vector<2x32xf32>
    %228 = arith.mulf %221, %227 : vector<2x32xf32>
    %229 = vector.extract_strided_slice %169 {offsets = [6, 0], sizes = [2, 128], strides = [1, 1]} : vector<16x128xf32> to vector<2x128xf32>
    %230 = arith.truncf %228 : vector<2x32xf32> to vector<2x32xbf16>
    %cst_40 = arith.constant dense<0.000000e+00> : vector<2x128xf32>
    %231 = tpu.matmul %230, %4, %cst_40 {dimension_numbers = #tpu.dot_dimension_numbers<[1], [0], [0], [1], [0, 0, 1, 1], [], []>} : vector<2x32xbf16>, vector<32x128xbf16>, vector<2x128xf32> -> vector<2x128xf32>
    %232 = arith.addf %229, %231 : vector<2x128xf32>
    %233 = arith.negf %232 : vector<2x128xf32>
    %234 = math.exp %233 : vector<2x128xf32>
    %cst_41 = arith.constant 1.000000e+00 : f32
    %235 = vector.broadcast %cst_41 : f32 to vector<2x128xf32>
    %236 = arith.addf %235, %234 : vector<2x128xf32>
    %237 = arith.divf %235, %236 : vector<2x128xf32>
    %238 = vector.extract_strided_slice %237 {offsets = [0, 0], sizes = [2, 32], strides = [1, 1]} : vector<2x128xf32> to vector<2x32xf32>
    %239 = vector.extract_strided_slice %237 {offsets = [0, 32], sizes = [2, 32], strides = [1, 1]} : vector<2x128xf32> to vector<2x32xf32>
    %240 = vector.extract_strided_slice %237 {offsets = [0, 96], sizes = [2, 32], strides = [1, 1]} : vector<2x128xf32> to vector<2x32xf32>
    %241 = vector.extract_strided_slice %232 {offsets = [0, 64], sizes = [2, 32], strides = [1, 1]} : vector<2x128xf32> to vector<2x32xf32>
    %242 = math.tanh %241 : vector<2x32xf32>
    %243 = arith.mulf %239, %226 : vector<2x32xf32>
    %244 = arith.mulf %238, %242 : vector<2x32xf32>
    %245 = arith.addf %243, %244 : vector<2x32xf32>
    %246 = math.tanh %245 : vector<2x32xf32>
    %247 = arith.mulf %240, %246 : vector<2x32xf32>
    %248 = vector.extract_strided_slice %169 {offsets = [8, 0], sizes = [2, 128], strides = [1, 1]} : vector<16x128xf32> to vector<2x128xf32>
    %249 = arith.truncf %247 : vector<2x32xf32> to vector<2x32xbf16>
    %cst_42 = arith.constant dense<0.000000e+00> : vector<2x128xf32>
    %250 = tpu.matmul %249, %4, %cst_42 {dimension_numbers = #tpu.dot_dimension_numbers<[1], [0], [0], [1], [0, 0, 1, 1], [], []>} : vector<2x32xbf16>, vector<32x128xbf16>, vector<2x128xf32> -> vector<2x128xf32>
    %251 = arith.addf %248, %250 : vector<2x128xf32>
    %252 = arith.negf %251 : vector<2x128xf32>
    %253 = math.exp %252 : vector<2x128xf32>
    %cst_43 = arith.constant 1.000000e+00 : f32
    %254 = vector.broadcast %cst_43 : f32 to vector<2x128xf32>
    %255 = arith.addf %254, %253 : vector<2x128xf32>
    %256 = arith.divf %254, %255 : vector<2x128xf32>
    %257 = vector.extract_strided_slice %256 {offsets = [0, 0], sizes = [2, 32], strides = [1, 1]} : vector<2x128xf32> to vector<2x32xf32>
    %258 = vector.extract_strided_slice %256 {offsets = [0, 32], sizes = [2, 32], strides = [1, 1]} : vector<2x128xf32> to vector<2x32xf32>
    %259 = vector.extract_strided_slice %256 {offsets = [0, 96], sizes = [2, 32], strides = [1, 1]} : vector<2x128xf32> to vector<2x32xf32>
    %260 = vector.extract_strided_slice %251 {offsets = [0, 64], sizes = [2, 32], strides = [1, 1]} : vector<2x128xf32> to vector<2x32xf32>
    %261 = math.tanh %260 : vector<2x32xf32>
    %262 = arith.mulf %258, %245 : vector<2x32xf32>
    %263 = arith.mulf %257, %261 : vector<2x32xf32>
    %264 = arith.addf %262, %263 : vector<2x32xf32>
    %265 = math.tanh %264 : vector<2x32xf32>
    %266 = arith.mulf %259, %265 : vector<2x32xf32>
    %267 = vector.extract_strided_slice %169 {offsets = [10, 0], sizes = [2, 128], strides = [1, 1]} : vector<16x128xf32> to vector<2x128xf32>
    %268 = arith.truncf %266 : vector<2x32xf32> to vector<2x32xbf16>
    %cst_44 = arith.constant dense<0.000000e+00> : vector<2x128xf32>
    %269 = tpu.matmul %268, %4, %cst_44 {dimension_numbers = #tpu.dot_dimension_numbers<[1], [0], [0], [1], [0, 0, 1, 1], [], []>} : vector<2x32xbf16>, vector<32x128xbf16>, vector<2x128xf32> -> vector<2x128xf32>
    %270 = arith.addf %267, %269 : vector<2x128xf32>
    %271 = arith.negf %270 : vector<2x128xf32>
    %272 = math.exp %271 : vector<2x128xf32>
    %cst_45 = arith.constant 1.000000e+00 : f32
    %273 = vector.broadcast %cst_45 : f32 to vector<2x128xf32>
    %274 = arith.addf %273, %272 : vector<2x128xf32>
    %275 = arith.divf %273, %274 : vector<2x128xf32>
    %276 = vector.extract_strided_slice %275 {offsets = [0, 0], sizes = [2, 32], strides = [1, 1]} : vector<2x128xf32> to vector<2x32xf32>
    %277 = vector.extract_strided_slice %275 {offsets = [0, 32], sizes = [2, 32], strides = [1, 1]} : vector<2x128xf32> to vector<2x32xf32>
    %278 = vector.extract_strided_slice %275 {offsets = [0, 96], sizes = [2, 32], strides = [1, 1]} : vector<2x128xf32> to vector<2x32xf32>
    %279 = vector.extract_strided_slice %270 {offsets = [0, 64], sizes = [2, 32], strides = [1, 1]} : vector<2x128xf32> to vector<2x32xf32>
    %280 = math.tanh %279 : vector<2x32xf32>
    %281 = arith.mulf %277, %264 : vector<2x32xf32>
    %282 = arith.mulf %276, %280 : vector<2x32xf32>
    %283 = arith.addf %281, %282 : vector<2x32xf32>
    %284 = math.tanh %283 : vector<2x32xf32>
    %285 = arith.mulf %278, %284 : vector<2x32xf32>
    %286 = vector.extract_strided_slice %169 {offsets = [12, 0], sizes = [2, 128], strides = [1, 1]} : vector<16x128xf32> to vector<2x128xf32>
    %287 = arith.truncf %285 : vector<2x32xf32> to vector<2x32xbf16>
    %cst_46 = arith.constant dense<0.000000e+00> : vector<2x128xf32>
    %288 = tpu.matmul %287, %4, %cst_46 {dimension_numbers = #tpu.dot_dimension_numbers<[1], [0], [0], [1], [0, 0, 1, 1], [], []>} : vector<2x32xbf16>, vector<32x128xbf16>, vector<2x128xf32> -> vector<2x128xf32>
    %289 = arith.addf %286, %288 : vector<2x128xf32>
    %290 = arith.negf %289 : vector<2x128xf32>
    %291 = math.exp %290 : vector<2x128xf32>
    %cst_47 = arith.constant 1.000000e+00 : f32
    %292 = vector.broadcast %cst_47 : f32 to vector<2x128xf32>
    %293 = arith.addf %292, %291 : vector<2x128xf32>
    %294 = arith.divf %292, %293 : vector<2x128xf32>
    %295 = vector.extract_strided_slice %294 {offsets = [0, 0], sizes = [2, 32], strides = [1, 1]} : vector<2x128xf32> to vector<2x32xf32>
    %296 = vector.extract_strided_slice %294 {offsets = [0, 32], sizes = [2, 32], strides = [1, 1]} : vector<2x128xf32> to vector<2x32xf32>
    %297 = vector.extract_strided_slice %294 {offsets = [0, 96], sizes = [2, 32], strides = [1, 1]} : vector<2x128xf32> to vector<2x32xf32>
    %298 = vector.extract_strided_slice %289 {offsets = [0, 64], sizes = [2, 32], strides = [1, 1]} : vector<2x128xf32> to vector<2x32xf32>
    %299 = math.tanh %298 : vector<2x32xf32>
    %300 = arith.mulf %296, %283 : vector<2x32xf32>
    %301 = arith.mulf %295, %299 : vector<2x32xf32>
    %302 = arith.addf %300, %301 : vector<2x32xf32>
    %303 = math.tanh %302 : vector<2x32xf32>
    %304 = arith.mulf %297, %303 : vector<2x32xf32>
    %305 = vector.extract_strided_slice %169 {offsets = [14, 0], sizes = [2, 128], strides = [1, 1]} : vector<16x128xf32> to vector<2x128xf32>
    %306 = arith.truncf %304 : vector<2x32xf32> to vector<2x32xbf16>
    %cst_48 = arith.constant dense<0.000000e+00> : vector<2x128xf32>
    %307 = tpu.matmul %306, %4, %cst_48 {dimension_numbers = #tpu.dot_dimension_numbers<[1], [0], [0], [1], [0, 0, 1, 1], [], []>} : vector<2x32xbf16>, vector<32x128xbf16>, vector<2x128xf32> -> vector<2x128xf32>
    %308 = arith.addf %305, %307 : vector<2x128xf32>
    %309 = arith.negf %308 : vector<2x128xf32>
    %310 = math.exp %309 : vector<2x128xf32>
    %cst_49 = arith.constant 1.000000e+00 : f32
    %311 = vector.broadcast %cst_49 : f32 to vector<2x128xf32>
    %312 = arith.addf %311, %310 : vector<2x128xf32>
    %313 = arith.divf %311, %312 : vector<2x128xf32>
    %314 = vector.extract_strided_slice %313 {offsets = [0, 0], sizes = [2, 32], strides = [1, 1]} : vector<2x128xf32> to vector<2x32xf32>
    %315 = vector.extract_strided_slice %313 {offsets = [0, 32], sizes = [2, 32], strides = [1, 1]} : vector<2x128xf32> to vector<2x32xf32>
    %316 = vector.extract_strided_slice %313 {offsets = [0, 96], sizes = [2, 32], strides = [1, 1]} : vector<2x128xf32> to vector<2x32xf32>
    %317 = vector.extract_strided_slice %308 {offsets = [0, 64], sizes = [2, 32], strides = [1, 1]} : vector<2x128xf32> to vector<2x32xf32>
    %318 = math.tanh %317 : vector<2x32xf32>
    %319 = arith.mulf %315, %302 : vector<2x32xf32>
    %320 = arith.mulf %314, %318 : vector<2x32xf32>
    %321 = arith.addf %319, %320 : vector<2x32xf32>
    %322 = math.tanh %321 : vector<2x32xf32>
    %323 = arith.mulf %316, %322 : vector<2x32xf32>
    %324 = tpu.concatenate %190, %209, %228, %247, %266, %285, %304, %323 in 1 : vector<2x32xf32>, vector<2x32xf32>, vector<2x32xf32>, vector<2x32xf32>, vector<2x32xf32>, vector<2x32xf32>, vector<2x32xf32>, vector<2x32xf32> -> vector<2x256xf32>
    %c0_50 = arith.constant 0 : index
    %c0_51 = arith.constant 0 : index
    %325 = vector.load %arg7[%c0_50, %c0_51] : memref<2x256xf32, #tpu.memory_space<vmem>>, vector<2x256xf32>
    tpu.vector_store %arg7[%c0_50, %c0_51], %324 {strides = array<i32>} : memref<2x256xf32, #tpu.memory_space<vmem>>, vector<2x256xf32>,
    return
  }
}

</mosaic_0001>

<llo_original>
// kernel: basic_rnn_forward.1
$region0: #{basic_rnn_forward.1}
  #allocation0 [shape = 'u32[]', space=smem, size = 0x4, offset = 0x4, fixed_abs, tag = 'smem constant byte address 0x4 - core index']
  #allocation1 [shape = 'u32[144,128]{1,0:T(1,128)}', space=vmem, size = 0x12000, scoped, tag = 'internal scratch']
  %s0 = inlined_call_operand.vmem [shape: f32[16,16], index: 0, kind: input, shape index: {}]
  %s1 = inlined_call_operand.vmem [shape: bf16[16,128], index: 1, kind: input, shape index: {}]
  %s2 = inlined_call_operand.vmem [shape: bf16[32,128], index: 2, kind: input, shape index: {}]
  %s3 = inlined_call_operand.vmem [shape: f32[1,128], index: 3, kind: input, shape index: {}]
  %s4 = inlined_call_operand.vmem [shape: bf16[32,128], index: 4, kind: input, shape index: {}]
  %s5 = inlined_call_operand.vmem [shape: bf16[32,128], index: 5, kind: input, shape index: {}]
  %s6 = inlined_call_operand.vmem [shape: f32[1,128], index: 6, kind: input, shape index: {}]
  %s7 = inlined_call_operand.vmem [shape: f32[2,256], index: 7, kind: output, shape index: {}]
  %s8 = sld [smem:[#allocation0]]
  $region38: #{basic_rnn_forward.1} parent=0
    _
  %s10 = ssub.s32 1, %s8
  %s11 = scalar_select 0, %s10, %s8
  // Predicated region
  $region2: #{basic_rnn_forward.1} parent=0 // pred_check
    _
  $region3: #{basic_rnn_forward.1} parent=0 // pred_check_branch
    %13 = sbr.rel (0) target = $region5
  $region4: #{basic_rnn_forward.1} parent=0 // pred_region
    _
  $region5: #{basic_rnn_forward.1} parent=0 // pred_fallthru
    _
  // Predicated region
  $region6: #{basic_rnn_forward.1} parent=0 // pred_check
    _
  $region7: #{basic_rnn_forward.1} parent=0 // pred_check_branch
    %15 = sbr.rel (0) target = $region9
  $region8: #{basic_rnn_forward.1} parent=0 // pred_region
    _
  $region9: #{basic_rnn_forward.1} parent=0 // pred_fallthru
    _
  // Predicated region
  $region10: #{basic_rnn_forward.1} parent=0 // pred_check
    _
  $region11: #{basic_rnn_forward.1} parent=0 // pred_check_branch
    %17 = sbr.rel (0) target = $region13
  $region12: #{basic_rnn_forward.1} parent=0 // pred_region
    _
  $region13: #{basic_rnn_forward.1} parent=0 // pred_fallthru
    _
  // Predicated region
  $region14: #{basic_rnn_forward.1} parent=0 // pred_check
    _
  $region15: #{basic_rnn_forward.1} parent=0 // pred_check_branch
    %19 = sbr.rel (0) target = $region17
  $region16: #{basic_rnn_forward.1} parent=0 // pred_region
    _
  $region17: #{basic_rnn_forward.1} parent=0 // pred_fallthru
    _
  // Predicated region
  $region18: #{basic_rnn_forward.1} parent=0 // pred_check
    _
  $region19: #{basic_rnn_forward.1} parent=0 // pred_check_branch
    %21 = sbr.rel (0) target = $region21
  $region20: #{basic_rnn_forward.1} parent=0 // pred_region
    _
  $region21: #{basic_rnn_forward.1} parent=0 // pred_fallthru
    _
  // Predicated region
  $region22: #{basic_rnn_forward.1} parent=0 // pred_check
    _
  $region23: #{basic_rnn_forward.1} parent=0 // pred_check_branch
    %23 = sbr.rel (0) target = $region25
  $region24: #{basic_rnn_forward.1} parent=0 // pred_region
    _
  $region25: #{basic_rnn_forward.1} parent=0 // pred_fallthru
    _
  // Predicated region
  $region26: #{basic_rnn_forward.1} parent=0 // pred_check
    _
  $region27: #{basic_rnn_forward.1} parent=0 // pred_check_branch
    %25 = sbr.rel (0) target = $region29
  $region28: #{basic_rnn_forward.1} parent=0 // pred_region
    _
  $region29: #{basic_rnn_forward.1} parent=0 // pred_fallthru
    _
  %v27 = vld [vmem:[%s1] sm:$0xf]
  %v28 = vld [vmem:[%s1 + $0x4] sm:$0xf]
  %v29 = vld [vmem:[%s2] sm:$0xf]
  %v30 = vld [vmem:[%s2 + $0x4] sm:$0xf]
  %v31 = vld [vmem:[%s2 + $0x8] sm:$0xf]
  %v32 = vld [vmem:[%s2 + $0xc] sm:$0xf]
  %v33 = vld [vmem:[%s3] sm:$0x1]
  %v34 = vld [vmem:[%s4] sm:$0xf]
  %v35 = vld [vmem:[%s4 + $0x4] sm:$0xf]
  %v36 = vld [vmem:[%s4 + $0x8] sm:$0xf]
  %v37 = vld [vmem:[%s4 + $0xc] sm:$0xf]
  %v38 = vld [vmem:[%s5] sm:$0xf]
  %v39 = vld [vmem:[%s5 + $0x4] sm:$0xf]
  %v40 = vld [vmem:[%s5 + $0x8] sm:$0xf]
  %v41 = vld [vmem:[%s5 + $0xc] sm:$0xf]
  %v42 = vld [vmem:[%s6] sm:$0x1]
  %v43 = vld [vmem:[%s0] sm:$0xff]
  %v44 = vld [vmem:[%s0 + $0x8] sm:$0xff]
  %v45 = vpack.c.bf16 %v44, %v43
  %v47 = vlaneseq
  %v48 = vshrl.u32 %v47, 7
  %v49 = vsub.s32 0, %v48
  %v50 = vrot.slane %v33, %v49
  %v54 = vunpack.c.l.b16 %v27
  %v55 = vunpack.c.l.b16 %v28
  %v56 = vpack.c.b16 %v55, %v54
  %vm58 = vcmask 130048
  %v60 = vsel %vm58, %v45, 0
  %62 = vmatprep.subr.bf16.mxu0 0
  %63 = vmatpush1.bf16.msra.mxu0 0
  %64 = vmatprep.subr.bf16.mxu0 0
  %65 = vmatpush1.bf16.msra.mxu0 0
  %66 = vmatprep.subr.bf16.mxu0 0
  %67 = vmatpush1.bf16.msra.mxu0 0
  %68 = vmatprep.subr.bf16.mxu0 0
  %69 = vmatpush1.bf16.msra.mxu0 0
  %70 = vmatprep.subr.bf16.mxu0 0
  %71 = vmatpush1.bf16.msra.mxu0 0
  %72 = vmatprep.subr.bf16.mxu0 0
  %73 = vmatpush1.bf16.msra.mxu0 0
  %74 = vmatprep.subr.bf16.mxu0 0
  %75 = vmatpush1.bf16.msra.mxu0 0
  %76 = vmatprep.subr.bf16.mxu0 0
  %77 = vmatpush1.bf16.msra.mxu0 %v56
  %78 = vmatprep.subr.bf16.mxu0 0
  %79 = vmatpush2.bf16.msra.mxu0 0
  %80 = vmatprep.subr.bf16.mxu0 0
  %81 = vmatpush2.bf16.msra.mxu0 0
  %82 = vmatprep.subr.bf16.mxu0 0
  %83 = vmatpush2.bf16.msra.mxu0 0
  %84 = vmatprep.subr.bf16.mxu0 0
  %85 = vmatpush2.bf16.msra.mxu0 0
  %86 = vmatprep.subr.bf16.mxu0 0
  %87 = vmatpush2.bf16.msra.mxu0 0
  %88 = vmatprep.subr.bf16.mxu0 0
  %89 = vmatpush2.bf16.msra.mxu0 0
  %90 = vmatprep.subr.bf16.mxu0 0
  %91 = vmatpush2.bf16.msra.mxu0 0
  %92 = vmatprep.subr.bf16.mxu0 0
  %93 = vmatpush2.bf16.msra.mxu0 0
  %94 = vmatprep.mubr.bf16.mxu0 0
  %95 = vmatmul.mubr.bf16.gmra.mxu0 %v60
  %v96 = vpop.f32.mrf.mxu0
  %v97 = vadd.f32 %v50, %v96
  %v98 = vpop.f32.mrf.mxu0
  %v99 = vpop.f32.mrf.mxu0
  %v100 = vadd.f32 %v50, %v99
  %v101 = vpop.f32.mrf.mxu0
  %102 = vdwg.mxu0
  %v107 = vunpack.c.l.b16 %v29
  %v108 = vunpack.c.l.b16 %v30
  %v109 = vunpack.c.l.b16 %v31
  %v110 = vunpack.c.l.b16 %v32
  %v111 = vpack.c.b16 %v108, %v107
  %v112 = vpack.c.b16 %v110, %v109
  %vm115 = vcmask 261120
  %v117 = vsel %vm115, 0, 0
  %119 = vmatprep.subr.bf16.mxu0 0
  %120 = vmatpush1.bf16.msra.mxu0 0
  %121 = vmatprep.subr.bf16.mxu0 0
  %122 = vmatpush1.bf16.msra.mxu0 0
  %123 = vmatprep.subr.bf16.mxu0 0
  %124 = vmatpush1.bf16.msra.mxu0 0
  %125 = vmatprep.subr.bf16.mxu0 0
  %126 = vmatpush1.bf16.msra.mxu0 0
  %127 = vmatprep.subr.bf16.mxu0 0
  %128 = vmatpush1.bf16.msra.mxu0 0
  %129 = vmatprep.subr.bf16.mxu0 0
  %130 = vmatpush1.bf16.msra.mxu0 0
  %131 = vmatprep.subr.bf16.mxu0 0
  %132 = vmatpush1.bf16.msra.mxu0 %v112
  %133 = vmatprep.subr.bf16.mxu0 0
  %134 = vmatpush1.bf16.msra.mxu0 %v111
  %135 = vmatprep.subr.bf16.mxu0 0
  %136 = vmatpush2.bf16.msra.mxu0 0
  %137 = vmatprep.subr.bf16.mxu0 0
  %138 = vmatpush2.bf16.msra.mxu0 0
  %139 = vmatprep.subr.bf16.mxu0 0
  %140 = vmatpush2.bf16.msra.mxu0 0
  %141 = vmatprep.subr.bf16.mxu0 0
  %142 = vmatpush2.bf16.msra.mxu0 0
  %143 = vmatprep.subr.bf16.mxu0 0
  %144 = vmatpush2.bf16.msra.mxu0 0
  %145 = vmatprep.subr.bf16.mxu0 0
  %146 = vmatpush2.bf16.msra.mxu0 0
  %147 = vmatprep.subr.bf16.mxu0 0
  %148 = vmatpush2.bf16.msra.mxu0 0
  %149 = vmatprep.subr.bf16.mxu0 0
  %150 = vmatpush2.bf16.msra.mxu0 0
  %151 = vmatprep.mubr.bf16.mxu0 0
  %152 = vmatmul.mubr.bf16.gmra.mxu0 %v117
  %v153 = vpop.f32.mrf.mxu0
  %v154 = vadd.f32 0.0, %v153
  %v155 = vpop.f32.mrf.mxu0
  %v156 = vpop.f32.mrf.mxu0
  %v157 = vpop.f32.mrf.mxu0
  %158 = vdwg.mxu0
  %v159 = vadd.f32 %v97, %v154
  %v160 = vxor.u32 %v159, 2147483648
  %v161 = vmul.f32 %v160, 1.442695
  %v162 = vpow.pop %v161
  %v163 = vadd.f32 %v162, 1.0
  %v164 = vrcp.pop %v163
  %v165 = vmul.f32 1.0, %v164
  %v166 = vtanh.pop %v159
  %v167 = vmul.f32 %v165, 0.0
  %169 = vrot.lane.b32.xlu0 %v166, 64
  %v170 = vpop.permute.xlu0 %169
  %v172 = vmul.f32 %v165, %v170
  %174 = vrot.lane.b32.xlu0 %v172, 32
  %v175 = vpop.permute.xlu0 %174
  %v177 = vadd.f32 %v167, %v175
  %v178 = vtanh.pop %v177
  %180 = vrot.lane.b32.xlu0 %v178, 64
  %v181 = vpop.permute.xlu0 %180
  %v183 = vmul.f32 %v165, %v181
  %v184 = vpack.c.bf16 %v183, %v183
  %186 = vrot.lane.b32.xlu0 %v184, 32
  %v187 = vpop.permute.xlu0 %186
  %v189 = vsel %vm115, %v187, 0
  %191 = vmatprep.subr.bf16.mxu0 0
  %192 = vmatpush1.bf16.msra.mxu0 0
  %193 = vmatprep.subr.bf16.mxu0 0
  %194 = vmatpush1.bf16.msra.mxu0 0
  %195 = vmatprep.subr.bf16.mxu0 0
  %196 = vmatpush1.bf16.msra.mxu0 0
  %197 = vmatprep.subr.bf16.mxu0 0
  %198 = vmatpush1.bf16.msra.mxu0 0
  %199 = vmatprep.subr.bf16.mxu0 0
  %200 = vmatpush1.bf16.msra.mxu0 0
  %201 = vmatprep.subr.bf16.mxu0 0
  %202 = vmatpush1.bf16.msra.mxu0 0
  %203 = vmatprep.subr.bf16.mxu0 0
  %204 = vmatpush1.bf16.msra.mxu0 %v112
  %205 = vmatprep.subr.bf16.mxu0 0
  %206 = vmatpush1.bf16.msra.mxu0 %v111
  %207 = vmatprep.subr.bf16.mxu0 0
  %208 = vmatpush2.bf16.msra.mxu0 0
  %209 = vmatprep.subr.bf16.mxu0 0
  %210 = vmatpush2.bf16.msra.mxu0 0
  %211 = vmatprep.subr.bf16.mxu0 0
  %212 = vmatpush2.bf16.msra.mxu0 0
  %213 = vmatprep.subr.bf16.mxu0 0
  %214 = vmatpush2.bf16.msra.mxu0 0
  %215 = vmatprep.subr.bf16.mxu0 0
  %216 = vmatpush2.bf16.msra.mxu0 0
  %217 = vmatprep.subr.bf16.mxu0 0
  %218 = vmatpush2.bf16.msra.mxu0 0
  %219 = vmatprep.subr.bf16.mxu0 0
  %220 = vmatpush2.bf16.msra.mxu0 0
  %221 = vmatprep.subr.bf16.mxu0 0
  %222 = vmatpush2.bf16.msra.mxu0 0
  %223 = vmatprep.mubr.bf16.mxu0 0
  %224 = vmatmul.mubr.bf16.gmra.mxu0 %v189
  %v225 = vpop.f32.mrf.mxu0
  %v226 = vadd.f32 0.0, %v225
  %v227 = vpop.f32.mrf.mxu0
  %v228 = vpop.f32.mrf.mxu0
  %v229 = vpop.f32.mrf.mxu0
  %230 = vdwg.mxu0
  %v232 = vrot.slane %v226, 6
  %v234 = vadd.f32 %v97, %v232
  %v235 = vxor.u32 %v234, 2147483648
  %v236 = vmul.f32 %v235, 1.442695
  %v237 = vpow.pop %v236
  %v238 = vadd.f32 %v237, 1.0
  %v239 = vrcp.pop %v238
  %v240 = vmul.f32 1.0, %v239
  %v241 = vtanh.pop %v234
  %v243 = vrot.slane %v177, 6
  %v245 = vmul.f32 %v240, %v243
  %247 = vrot.lane.b32.xlu0 %v241, 64
  %v248 = vpop.permute.xlu0 %247
  %v250 = vmul.f32 %v240, %v248
  %252 = vrot.lane.b32.xlu0 %v250, 32
  %v253 = vpop.permute.xlu0 %252
  %v255 = vadd.f32 %v245, %v253
  %v256 = vtanh.pop %v255
  %258 = vrot.lane.b32.xlu0 %v256, 64
  %v259 = vpop.permute.xlu0 %258
  %v261 = vmul.f32 %v240, %v259
  %v262 = vpack.c.bf16 %v261, %v261
  %v264 = vrot.slane %v262, 1
  %265 = vrot.lane.b32.xlu0 %v264, 32
  %v266 = vpop.permute.xlu0 %265
  %v268 = vsel %vm115, %v266, 0
  %270 = vmatprep.subr.bf16.mxu0 0
  %271 = vmatpush1.bf16.msra.mxu0 0
  %272 = vmatprep.subr.bf16.mxu0 0
  %273 = vmatpush1.bf16.msra.mxu0 0
  %274 = vmatprep.subr.bf16.mxu0 0
  %275 = vmatpush1.bf16.msra.mxu0 0
  %276 = vmatprep.subr.bf16.mxu0 0
  %277 = vmatpush1.bf16.msra.mxu0 0
  %278 = vmatprep.subr.bf16.mxu0 0
  %279 = vmatpush1.bf16.msra.mxu0 0
  %280 = vmatprep.subr.bf16.mxu0 0
  %281 = vmatpush1.bf16.msra.mxu0 0
  %282 = vmatprep.subr.bf16.mxu0 0
  %283 = vmatpush1.bf16.msra.mxu0 %v112
  %284 = vmatprep.subr.bf16.mxu0 0
  %285 = vmatpush1.bf16.msra.mxu0 %v111
  %286 = vmatprep.subr.bf16.mxu0 0
  %287 = vmatpush2.bf16.msra.mxu0 0
  %288 = vmatprep.subr.bf16.mxu0 0
  %289 = vmatpush2.bf16.msra.mxu0 0
  %290 = vmatprep.subr.bf16.mxu0 0
  %291 = vmatpush2.bf16.msra.mxu0 0
  %292 = vmatprep.subr.bf16.mxu0 0
  %293 = vmatpush2.bf16.msra.mxu0 0
  %294 = vmatprep.subr.bf16.mxu0 0
  %295 = vmatpush2.bf16.msra.mxu0 0
  %296 = vmatprep.subr.bf16.mxu0 0
  %297 = vmatpush2.bf16.msra.mxu0 0
  %298 = vmatprep.subr.bf16.mxu0 0
  %299 = vmatpush2.bf16.msra.mxu0 0
  %300 = vmatprep.subr.bf16.mxu0 0
  %301 = vmatpush2.bf16.msra.mxu0 0
  %302 = vmatprep.mubr.bf16.mxu0 0
  %303 = vmatmul.mubr.bf16.gmra.mxu0 %v268
  %v304 = vpop.f32.mrf.mxu0
  %v305 = vadd.f32 0.0, %v304
  %v306 = vpop.f32.mrf.mxu0
  %v307 = vpop.f32.mrf.mxu0
  %v308 = vpop.f32.mrf.mxu0
  %309 = vdwg.mxu0
  %v311 = vrot.slane %v305, 4
  %v313 = vadd.f32 %v97, %v311
  %v314 = vxor.u32 %v313, 2147483648
  %v315 = vmul.f32 %v314, 1.442695
  %v316 = vpow.pop %v315
  %v317 = vadd.f32 %v316, 1.0
  %v318 = vrcp.pop %v317
  %v319 = vmul.f32 1.0, %v318
  %v320 = vtanh.pop %v313
  %v322 = vrot.slane %v255, 6
  %v324 = vmul.f32 %v319, %v322
  %326 = vrot.lane.b32.xlu0 %v320, 64
  %v327 = vpop.permute.xlu0 %326
  %v329 = vmul.f32 %v319, %v327
  %331 = vrot.lane.b32.xlu0 %v329, 32
  %v332 = vpop.permute.xlu0 %331
  %v334 = vadd.f32 %v324, %v332
  %v335 = vtanh.pop %v334
  %337 = vrot.lane.b32.xlu0 %v335, 64
  %v338 = vpop.permute.xlu0 %337
  %v340 = vmul.f32 %v319, %v338
  %v341 = vpack.c.bf16 %v340, %v340
  %v343 = vrot.slane %v341, 2
  %344 = vrot.lane.b32.xlu0 %v343, 32
  %v345 = vpop.permute.xlu0 %344
  %v347 = vsel %vm115, %v345, 0
  %349 = vmatprep.subr.bf16.mxu0 0
  %350 = vmatpush1.bf16.msra.mxu0 0
  %351 = vmatprep.subr.bf16.mxu0 0
  %352 = vmatpush1.bf16.msra.mxu0 0
  %353 = vmatprep.subr.bf16.mxu0 0
  %354 = vmatpush1.bf16.msra.mxu0 0
  %355 = vmatprep.subr.bf16.mxu0 0
  %356 = vmatpush1.bf16.msra.mxu0 0
  %357 = vmatprep.subr.bf16.mxu0 0
  %358 = vmatpush1.bf16.msra.mxu0 0
  %359 = vmatprep.subr.bf16.mxu0 0
  %360 = vmatpush1.bf16.msra.mxu0 0
  %361 = vmatprep.subr.bf16.mxu0 0
  %362 = vmatpush1.bf16.msra.mxu0 %v112
  %363 = vmatprep.subr.bf16.mxu0 0
  %364 = vmatpush1.bf16.msra.mxu0 %v111
  %365 = vmatprep.subr.bf16.mxu0 0
  %366 = vmatpush2.bf16.msra.mxu0 0
  %367 = vmatprep.subr.bf16.mxu0 0
  %368 = vmatpush2.bf16.msra.mxu0 0
  %369 = vmatprep.subr.bf16.mxu0 0
  %370 = vmatpush2.bf16.msra.mxu0 0
  %371 = vmatprep.subr.bf16.mxu0 0
  %372 = vmatpush2.bf16.msra.mxu0 0
  %373 = vmatprep.subr.bf16.mxu0 0
  %374 = vmatpush2.bf16.msra.mxu0 0
  %375 = vmatprep.subr.bf16.mxu0 0
  %376 = vmatpush2.bf16.msra.mxu0 0
  %377 = vmatprep.subr.bf16.mxu0 0
  %378 = vmatpush2.bf16.msra.mxu0 0
  %379 = vmatprep.subr.bf16.mxu0 0
  %380 = vmatpush2.bf16.msra.mxu0 0
  %381 = vmatprep.mubr.bf16.mxu0 0
  %382 = vmatmul.mubr.bf16.gmra.mxu0 %v347
  %v383 = vpop.f32.mrf.mxu0
  %v384 = vadd.f32 0.0, %v383
  %v385 = vpop.f32.mrf.mxu0
  %v386 = vpop.f32.mrf.mxu0
  %v387 = vpop.f32.mrf.mxu0
  %388 = vdwg.mxu0
  %v390 = vrot.slane %v384, 2
  %v392 = vadd.f32 %v97, %v390
  %v393 = vxor.u32 %v392, 2147483648
  %v394 = vmul.f32 %v393, 1.442695
  %v395 = vpow.pop %v394
  %v396 = vadd.f32 %v395, 1.0
  %v397 = vrcp.pop %v396
  %v398 = vmul.f32 1.0, %v397
  %v399 = vtanh.pop %v392
  %v401 = vrot.slane %v334, 6
  %v403 = vmul.f32 %v398, %v401
  %405 = vrot.lane.b32.xlu0 %v399, 64
  %v406 = vpop.permute.xlu0 %405
  %v408 = vmul.f32 %v398, %v406
  %410 = vrot.lane.b32.xlu0 %v408, 32
  %v411 = vpop.permute.xlu0 %410
  %v413 = vadd.f32 %v403, %v411
  %v414 = vtanh.pop %v413
  %416 = vrot.lane.b32.xlu0 %v414, 64
  %v417 = vpop.permute.xlu0 %416
  %v419 = vmul.f32 %v398, %v417
  %v420 = vpack.c.bf16 %v419, %v419
  %v422 = vrot.slane %v420, 3
  %423 = vrot.lane.b32.xlu0 %v422, 32
  %v424 = vpop.permute.xlu0 %423
  %v426 = vsel %vm115, %v424, 0
  %428 = vmatprep.subr.bf16.mxu0 0
  %429 = vmatpush1.bf16.msra.mxu0 0
  %430 = vmatprep.subr.bf16.mxu0 0
  %431 = vmatpush1.bf16.msra.mxu0 0
  %432 = vmatprep.subr.bf16.mxu0 0
  %433 = vmatpush1.bf16.msra.mxu0 0
  %434 = vmatprep.subr.bf16.mxu0 0
  %435 = vmatpush1.bf16.msra.mxu0 0
  %436 = vmatprep.subr.bf16.mxu0 0
  %437 = vmatpush1.bf16.msra.mxu0 0
  %438 = vmatprep.subr.bf16.mxu0 0
  %439 = vmatpush1.bf16.msra.mxu0 0
  %440 = vmatprep.subr.bf16.mxu0 0
  %441 = vmatpush1.bf16.msra.mxu0 %v112
  %442 = vmatprep.subr.bf16.mxu0 0
  %443 = vmatpush1.bf16.msra.mxu0 %v111
  %444 = vmatprep.subr.bf16.mxu0 0
  %445 = vmatpush2.bf16.msra.mxu0 0
  %446 = vmatprep.subr.bf16.mxu0 0
  %447 = vmatpush2.bf16.msra.mxu0 0
  %448 = vmatprep.subr.bf16.mxu0 0
  %449 = vmatpush2.bf16.msra.mxu0 0
  %450 = vmatprep.subr.bf16.mxu0 0
  %451 = vmatpush2.bf16.msra.mxu0 0
  %452 = vmatprep.subr.bf16.mxu0 0
  %453 = vmatpush2.bf16.msra.mxu0 0
  %454 = vmatprep.subr.bf16.mxu0 0
  %455 = vmatpush2.bf16.msra.mxu0 0
  %456 = vmatprep.subr.bf16.mxu0 0
  %457 = vmatpush2.bf16.msra.mxu0 0
  %458 = vmatprep.subr.bf16.mxu0 0
  %459 = vmatpush2.bf16.msra.mxu0 0
  %460 = vmatprep.mubr.bf16.mxu0 0
  %461 = vmatmul.mubr.bf16.gmra.mxu0 %v426
  %v462 = vpop.f32.mrf.mxu0
  %v463 = vadd.f32 0.0, %v462
  %v464 = vpop.f32.mrf.mxu0
  %v465 = vpop.f32.mrf.mxu0
  %v466 = vpop.f32.mrf.mxu0
  %467 = vdwg.mxu0
  %v468 = vadd.f32 %v100, %v463
  %v469 = vxor.u32 %v468, 2147483648
  %v470 = vmul.f32 %v469, 1.442695
  %v471 = vpow.pop %v470
  %v472 = vadd.f32 %v471, 1.0
  %v473 = vrcp.pop %v472
  %v474 = vmul.f32 1.0, %v473
  %v475 = vtanh.pop %v468
  %v477 = vrot.slane %v413, 6
  %v479 = vmul.f32 %v474, %v477
  %481 = vrot.lane.b32.xlu0 %v475, 64
  %v482 = vpop.permute.xlu0 %481
  %v484 = vmul.f32 %v474, %v482
  %486 = vrot.lane.b32.xlu0 %v484, 32
  %v487 = vpop.permute.xlu0 %486
  %v489 = vadd.f32 %v479, %v487
  %v490 = vtanh.pop %v489
  %492 = vrot.lane.b32.xlu0 %v490, 64
  %v493 = vpop.permute.xlu0 %492
  %v495 = vmul.f32 %v474, %v493
  %v496 = vpack.c.bf16 %v495, %v495
  %498 = vrot.lane.b32.xlu0 %v496, 32
  %v499 = vpop.permute.xlu0 %498
  %v501 = vsel %vm115, %v499, 0
  %503 = vmatprep.subr.bf16.mxu0 0
  %504 = vmatpush1.bf16.msra.mxu0 0
  %505 = vmatprep.subr.bf16.mxu0 0
  %506 = vmatpush1.bf16.msra.mxu0 0
  %507 = vmatprep.subr.bf16.mxu0 0
  %508 = vmatpush1.bf16.msra.mxu0 0
  %509 = vmatprep.subr.bf16.mxu0 0
  %510 = vmatpush1.bf16.msra.mxu0 0
  %511 = vmatprep.subr.bf16.mxu0 0
  %512 = vmatpush1.bf16.msra.mxu0 0
  %513 = vmatprep.subr.bf16.mxu0 0
  %514 = vmatpush1.bf16.msra.mxu0 0
  %515 = vmatprep.subr.bf16.mxu0 0
  %516 = vmatpush1.bf16.msra.mxu0 %v112
  %517 = vmatprep.subr.bf16.mxu0 0
  %518 = vmatpush1.bf16.msra.mxu0 %v111
  %519 = vmatprep.subr.bf16.mxu0 0
  %520 = vmatpush2.bf16.msra.mxu0 0
  %521 = vmatprep.subr.bf16.mxu0 0
  %522 = vmatpush2.bf16.msra.mxu0 0
  %523 = vmatprep.subr.bf16.mxu0 0
  %524 = vmatpush2.bf16.msra.mxu0 0
  %525 = vmatprep.subr.bf16.mxu0 0
  %526 = vmatpush2.bf16.msra.mxu0 0
  %527 = vmatprep.subr.bf16.mxu0 0
  %528 = vmatpush2.bf16.msra.mxu0 0
  %529 = vmatprep.subr.bf16.mxu0 0
  %530 = vmatpush2.bf16.msra.mxu0 0
  %531 = vmatprep.subr.bf16.mxu0 0
  %532 = vmatpush2.bf16.msra.mxu0 0
  %533 = vmatprep.subr.bf16.mxu0 0
  %534 = vmatpush2.bf16.msra.mxu0 0
  %535 = vmatprep.mubr.bf16.mxu0 0
  %536 = vmatmul.mubr.bf16.gmra.mxu0 %v501
  %v537 = vpop.f32.mrf.mxu0
  %v538 = vadd.f32 0.0, %v537
  %v539 = vpop.f32.mrf.mxu0
  %v540 = vpop.f32.mrf.mxu0
  %v541 = vpop.f32.mrf.mxu0
  %542 = vdwg.mxu0
  %v544 = vrot.slane %v538, 6
  %v546 = vadd.f32 %v100, %v544
  %v547 = vxor.u32 %v546, 2147483648
  %v548 = vmul.f32 %v547, 1.442695
  %v549 = vpow.pop %v548
  %v550 = vadd.f32 %v549, 1.0
  %v551 = vrcp.pop %v550
  %v552 = vmul.f32 1.0, %v551
  %v553 = vtanh.pop %v546
  %v555 = vrot.slane %v489, 6
  %v557 = vmul.f32 %v552, %v555
  %559 = vrot.lane.b32.xlu0 %v553, 64
  %v560 = vpop.permute.xlu0 %559
  %v562 = vmul.f32 %v552, %v560
  %564 = vrot.lane.b32.xlu0 %v562, 32
  %v565 = vpop.permute.xlu0 %564
  %v567 = vadd.f32 %v557, %v565
  %v568 = vtanh.pop %v567
  %570 = vrot.lane.b32.xlu0 %v568, 64
  %v571 = vpop.permute.xlu0 %570
  %v573 = vmul.f32 %v552, %v571
  %v574 = vpack.c.bf16 %v573, %v573
  %v576 = vrot.slane %v574, 1
  %577 = vrot.lane.b32.xlu0 %v576, 32
  %v578 = vpop.permute.xlu0 %577
  %v580 = vsel %vm115, %v578, 0
  %582 = vmatprep.subr.bf16.mxu0 0
  %583 = vmatpush1.bf16.msra.mxu0 0
  %584 = vmatprep.subr.bf16.mxu0 0
  %585 = vmatpush1.bf16.msra.mxu0 0
  %586 = vmatprep.subr.bf16.mxu0 0
  %587 = vmatpush1.bf16.msra.mxu0 0
  %588 = vmatprep.subr.bf16.mxu0 0
  %589 = vmatpush1.bf16.msra.mxu0 0
  %590 = vmatprep.subr.bf16.mxu0 0
  %591 = vmatpush1.bf16.msra.mxu0 0
  %592 = vmatprep.subr.bf16.mxu0 0
  %593 = vmatpush1.bf16.msra.mxu0 0
  %594 = vmatprep.subr.bf16.mxu0 0
  %595 = vmatpush1.bf16.msra.mxu0 %v112
  %596 = vmatprep.subr.bf16.mxu0 0
  %597 = vmatpush1.bf16.msra.mxu0 %v111
  %598 = vmatprep.subr.bf16.mxu0 0
  %599 = vmatpush2.bf16.msra.mxu0 0
  %600 = vmatprep.subr.bf16.mxu0 0
  %601 = vmatpush2.bf16.msra.mxu0 0
  %602 = vmatprep.subr.bf16.mxu0 0
  %603 = vmatpush2.bf16.msra.mxu0 0
  %604 = vmatprep.subr.bf16.mxu0 0
  %605 = vmatpush2.bf16.msra.mxu0 0
  %606 = vmatprep.subr.bf16.mxu0 0
  %607 = vmatpush2.bf16.msra.mxu0 0
  %608 = vmatprep.subr.bf16.mxu0 0
  %609 = vmatpush2.bf16.msra.mxu0 0
  %610 = vmatprep.subr.bf16.mxu0 0
  %611 = vmatpush2.bf16.msra.mxu0 0
  %612 = vmatprep.subr.bf16.mxu0 0
  %613 = vmatpush2.bf16.msra.mxu0 0
  %614 = vmatprep.mubr.bf16.mxu0 0
  %615 = vmatmul.mubr.bf16.gmra.mxu0 %v580
  %v616 = vpop.f32.mrf.mxu0
  %v617 = vadd.f32 0.0, %v616
  %v618 = vpop.f32.mrf.mxu0
  %v619 = vpop.f32.mrf.mxu0
  %v620 = vpop.f32.mrf.mxu0
  %621 = vdwg.mxu0
  %v623 = vrot.slane %v617, 4
  %v625 = vadd.f32 %v100, %v623
  %v626 = vxor.u32 %v625, 2147483648
  %v627 = vmul.f32 %v626, 1.442695
  %v628 = vpow.pop %v627
  %v629 = vadd.f32 %v628, 1.0
  %v630 = vrcp.pop %v629
  %v631 = vmul.f32 1.0, %v630
  %v632 = vtanh.pop %v625
  %v634 = vrot.slane %v567, 6
  %v636 = vmul.f32 %v631, %v634
  %638 = vrot.lane.b32.xlu0 %v632, 64
  %v639 = vpop.permute.xlu0 %638
  %v641 = vmul.f32 %v631, %v639
  %643 = vrot.lane.b32.xlu0 %v641, 32
  %v644 = vpop.permute.xlu0 %643
  %v646 = vadd.f32 %v636, %v644
  %v647 = vtanh.pop %v646
  %649 = vrot.lane.b32.xlu0 %v647, 64
  %v650 = vpop.permute.xlu0 %649
  %v652 = vmul.f32 %v631, %v650
  %v653 = vpack.c.bf16 %v652, %v652
  %v655 = vrot.slane %v653, 2
  %656 = vrot.lane.b32.xlu0 %v655, 32
  %v657 = vpop.permute.xlu0 %656
  %v659 = vsel %vm115, %v657, 0
  %661 = vmatprep.subr.bf16.mxu0 0
  %662 = vmatpush1.bf16.msra.mxu0 0
  %663 = vmatprep.subr.bf16.mxu0 0
  %664 = vmatpush1.bf16.msra.mxu0 0
  %665 = vmatprep.subr.bf16.mxu0 0
  %666 = vmatpush1.bf16.msra.mxu0 0
  %667 = vmatprep.subr.bf16.mxu0 0
  %668 = vmatpush1.bf16.msra.mxu0 0
  %669 = vmatprep.subr.bf16.mxu0 0
  %670 = vmatpush1.bf16.msra.mxu0 0
  %671 = vmatprep.subr.bf16.mxu0 0
  %672 = vmatpush1.bf16.msra.mxu0 0
  %673 = vmatprep.subr.bf16.mxu0 0
  %674 = vmatpush1.bf16.msra.mxu0 %v112
  %675 = vmatprep.subr.bf16.mxu0 0
  %676 = vmatpush1.bf16.msra.mxu0 %v111
  %677 = vmatprep.subr.bf16.mxu0 0
  %678 = vmatpush2.bf16.msra.mxu0 0
  %679 = vmatprep.subr.bf16.mxu0 0
  %680 = vmatpush2.bf16.msra.mxu0 0
  %681 = vmatprep.subr.bf16.mxu0 0
  %682 = vmatpush2.bf16.msra.mxu0 0
  %683 = vmatprep.subr.bf16.mxu0 0
  %684 = vmatpush2.bf16.msra.mxu0 0
  %685 = vmatprep.subr.bf16.mxu0 0
  %686 = vmatpush2.bf16.msra.mxu0 0
  %687 = vmatprep.subr.bf16.mxu0 0
  %688 = vmatpush2.bf16.msra.mxu0 0
  %689 = vmatprep.subr.bf16.mxu0 0
  %690 = vmatpush2.bf16.msra.mxu0 0
  %691 = vmatprep.subr.bf16.mxu0 0
  %692 = vmatpush2.bf16.msra.mxu0 0
  %693 = vmatprep.mubr.bf16.mxu0 0
  %694 = vmatmul.mubr.bf16.gmra.mxu0 %v659
  %v695 = vpop.f32.mrf.mxu0
  %v696 = vadd.f32 0.0, %v695
  %v697 = vpop.f32.mrf.mxu0
  %v698 = vpop.f32.mrf.mxu0
  %v699 = vpop.f32.mrf.mxu0
  %700 = vdwg.mxu0
  %v702 = vrot.slane %v696, 2
  %v704 = vadd.f32 %v100, %v702
  %v705 = vxor.u32 %v704, 2147483648
  %v706 = vmul.f32 %v705, 1.442695
  %v707 = vpow.pop %v706
  %v708 = vadd.f32 %v707, 1.0
  %v709 = vrcp.pop %v708
  %v710 = vmul.f32 1.0, %v709
  %v711 = vtanh.pop %v704
  %v713 = vrot.slane %v646, 6
  %v715 = vmul.f32 %v710, %v713
  %717 = vrot.lane.b32.xlu0 %v711, 64
  %v718 = vpop.permute.xlu0 %717
  %v720 = vmul.f32 %v710, %v718
  %722 = vrot.lane.b32.xlu0 %v720, 32
  %v723 = vpop.permute.xlu0 %722
  %v725 = vadd.f32 %v715, %v723
  %v726 = vtanh.pop %v725
  %728 = vrot.lane.b32.xlu0 %v726, 64
  %v729 = vpop.permute.xlu0 %728
  %v731 = vmul.f32 %v710, %v729
  %vm732 = vcmask 1041408
  %v733 = vsel %vm732, %v183, %v261
  %vm734 = vcmask 1043456
  %v735 = vsel %vm734, %v733, %v340
  %vm736 = vcmask 1045504
  %v737 = vsel %vm736, %v735, %v419
  %v738 = vsel %vm732, %v495, %v573
  %v739 = vsel %vm734, %v738, %v652
  %v740 = vsel %vm736, %v739, %v731
  %v741 = vpack.c.bf16 %v740, %v737
  %v743 = vlaneseq
  %v744 = vshrl.u32 %v743, 7
  %v745 = vsub.s32 0, %v744
  %v746 = vrot.slane %v42, %v745
  %749 = vrot.lane.b32.xlu0 %v741, 32
  %v750 = vpop.permute.xlu0 %749
  %v755 = vunpack.c.l.b16 %v34
  %v756 = vunpack.c.l.b16 %v35
  %v757 = vunpack.c.l.b16 %v36
  %v758 = vunpack.c.l.b16 %v37
  %v759 = vpack.c.b16 %v756, %v755
  %v760 = vpack.c.b16 %v758, %v757
  %v764 = vsel %vm115, %v750, 0
  %766 = vmatprep.subr.bf16.mxu0 0
  %767 = vmatpush1.bf16.msra.mxu0 0
  %768 = vmatprep.subr.bf16.mxu0 0
  %769 = vmatpush1.bf16.msra.mxu0 0
  %770 = vmatprep.subr.bf16.mxu0 0
  %771 = vmatpush1.bf16.msra.mxu0 0
  %772 = vmatprep.subr.bf16.mxu0 0
  %773 = vmatpush1.bf16.msra.mxu0 0
  %774 = vmatprep.subr.bf16.mxu0 0
  %775 = vmatpush1.bf16.msra.mxu0 0
  %776 = vmatprep.subr.bf16.mxu0 0
  %777 = vmatpush1.bf16.msra.mxu0 0
  %778 = vmatprep.subr.bf16.mxu0 0
  %779 = vmatpush1.bf16.msra.mxu0 %v760
  %780 = vmatprep.subr.bf16.mxu0 0
  %781 = vmatpush1.bf16.msra.mxu0 %v759
  %782 = vmatprep.subr.bf16.mxu0 0
  %783 = vmatpush2.bf16.msra.mxu0 0
  %784 = vmatprep.subr.bf16.mxu0 0
  %785 = vmatpush2.bf16.msra.mxu0 0
  %786 = vmatprep.subr.bf16.mxu0 0
  %787 = vmatpush2.bf16.msra.mxu0 0
  %788 = vmatprep.subr.bf16.mxu0 0
  %789 = vmatpush2.bf16.msra.mxu0 0
  %790 = vmatprep.subr.bf16.mxu0 0
  %791 = vmatpush2.bf16.msra.mxu0 0
  %792 = vmatprep.subr.bf16.mxu0 0
  %793 = vmatpush2.bf16.msra.mxu0 0
  %794 = vmatprep.subr.bf16.mxu0 0
  %795 = vmatpush2.bf16.msra.mxu0 0
  %796 = vmatprep.subr.bf16.mxu0 0
  %797 = vmatpush2.bf16.msra.mxu0 0
  %798 = vmatprep.mubr.bf16.mxu0 0
  %799 = vmatmul.mubr.bf16.gmra.mxu0 %v764
  %v800 = vpop.f32.mrf.mxu0
  %v801 = vadd.f32 %v746, %v800
  %v802 = vpop.f32.mrf.mxu0
  %v803 = vpop.f32.mrf.mxu0
  %v804 = vadd.f32 %v746, %v803
  %v805 = vpop.f32.mrf.mxu0
  %806 = vdwg.mxu0
  %v811 = vunpack.c.l.b16 %v38
  %v812 = vunpack.c.l.b16 %v39
  %v813 = vunpack.c.l.b16 %v40
  %v814 = vunpack.c.l.b16 %v41
  %v815 = vpack.c.b16 %v812, %v811
  %v816 = vpack.c.b16 %v814, %v813
  %819 = vmatprep.subr.bf16.mxu0 0
  %820 = vmatpush1.bf16.msra.mxu0 0
  %821 = vmatprep.subr.bf16.mxu0 0
  %822 = vmatpush1.bf16.msra.mxu0 0
  %823 = vmatprep.subr.bf16.mxu0 0
  %824 = vmatpush1.bf16.msra.mxu0 0
  %825 = vmatprep.subr.bf16.mxu0 0
  %826 = vmatpush1.bf16.msra.mxu0 0
  %827 = vmatprep.subr.bf16.mxu0 0
  %828 = vmatpush1.bf16.msra.mxu0 0
  %829 = vmatprep.subr.bf16.mxu0 0
  %830 = vmatpush1.bf16.msra.mxu0 0
  %831 = vmatprep.subr.bf16.mxu0 0
  %832 = vmatpush1.bf16.msra.mxu0 %v816
  %833 = vmatprep.subr.bf16.mxu0 0
  %834 = vmatpush1.bf16.msra.mxu0 %v815
  %835 = vmatprep.subr.bf16.mxu0 0
  %836 = vmatpush2.bf16.msra.mxu0 0
  %837 = vmatprep.subr.bf16.mxu0 0
  %838 = vmatpush2.bf16.msra.mxu0 0
  %839 = vmatprep.subr.bf16.mxu0 0
  %840 = vmatpush2.bf16.msra.mxu0 0
  %841 = vmatprep.subr.bf16.mxu0 0
  %842 = vmatpush2.bf16.msra.mxu0 0
  %843 = vmatprep.subr.bf16.mxu0 0
  %844 = vmatpush2.bf16.msra.mxu0 0
  %845 = vmatprep.subr.bf16.mxu0 0
  %846 = vmatpush2.bf16.msra.mxu0 0
  %847 = vmatprep.subr.bf16.mxu0 0
  %848 = vmatpush2.bf16.msra.mxu0 0
  %849 = vmatprep.subr.bf16.mxu0 0
  %850 = vmatpush2.bf16.msra.mxu0 0
  %851 = vmatprep.mubr.bf16.mxu0 0
  %852 = vmatmul.mubr.bf16.gmra.mxu0 %v117
  %v853 = vpop.f32.mrf.mxu0
  %v854 = vadd.f32 0.0, %v853
  %v855 = vpop.f32.mrf.mxu0
  %v856 = vpop.f32.mrf.mxu0
  %v857 = vpop.f32.mrf.mxu0
  %858 = vdwg.mxu0
  %v859 = vadd.f32 %v801, %v854
  %v860 = vxor.u32 %v859, 2147483648
  %v861 = vmul.f32 %v860, 1.442695
  %v862 = vpow.pop %v861
  %v863 = vadd.f32 %v862, 1.0
  %v864 = vrcp.pop %v863
  %v865 = vmul.f32 1.0, %v864
  %v866 = vtanh.pop %v859
  %v867 = vmul.f32 %v865, 0.0
  %869 = vrot.lane.b32.xlu0 %v866, 64
  %v870 = vpop.permute.xlu0 %869
  %v872 = vmul.f32 %v865, %v870
  %874 = vrot.lane.b32.xlu0 %v872, 32
  %v875 = vpop.permute.xlu0 %874
  %v877 = vadd.f32 %v867, %v875
  %v878 = vtanh.pop %v877
  %880 = vrot.lane.b32.xlu0 %v878, 64
  %v881 = vpop.permute.xlu0 %880
  %v883 = vmul.f32 %v865, %v881
  %v884 = vpack.c.bf16 %v883, %v883
  %886 = vrot.lane.b32.xlu0 %v884, 32
  %v887 = vpop.permute.xlu0 %886
  %v889 = vsel %vm115, %v887, 0
  %891 = vmatprep.subr.bf16.mxu0 0
  %892 = vmatpush1.bf16.msra.mxu0 0
  %893 = vmatprep.subr.bf16.mxu0 0
  %894 = vmatpush1.bf16.msra.mxu0 0
  %895 = vmatprep.subr.bf16.mxu0 0
  %896 = vmatpush1.bf16.msra.mxu0 0
  %897 = vmatprep.subr.bf16.mxu0 0
  %898 = vmatpush1.bf16.msra.mxu0 0
  %899 = vmatprep.subr.bf16.mxu0 0
  %900 = vmatpush1.bf16.msra.mxu0 0
  %901 = vmatprep.subr.bf16.mxu0 0
  %902 = vmatpush1.bf16.msra.mxu0 0
  %903 = vmatprep.subr.bf16.mxu0 0
  %904 = vmatpush1.bf16.msra.mxu0 %v816
  %905 = vmatprep.subr.bf16.mxu0 0
  %906 = vmatpush1.bf16.msra.mxu0 %v815
  %907 = vmatprep.subr.bf16.mxu0 0
  %908 = vmatpush2.bf16.msra.mxu0 0
  %909 = vmatprep.subr.bf16.mxu0 0
  %910 = vmatpush2.bf16.msra.mxu0 0
  %911 = vmatprep.subr.bf16.mxu0 0
  %912 = vmatpush2.bf16.msra.mxu0 0
  %913 = vmatprep.subr.bf16.mxu0 0
  %914 = vmatpush2.bf16.msra.mxu0 0
  %915 = vmatprep.subr.bf16.mxu0 0
  %916 = vmatpush2.bf16.msra.mxu0 0
  %917 = vmatprep.subr.bf16.mxu0 0
  %918 = vmatpush2.bf16.msra.mxu0 0
  %919 = vmatprep.subr.bf16.mxu0 0
  %920 = vmatpush2.bf16.msra.mxu0 0
  %921 = vmatprep.subr.bf16.mxu0 0
  %922 = vmatpush2.bf16.msra.mxu0 0
  %923 = vmatprep.mubr.bf16.mxu0 0
  %924 = vmatmul.mubr.bf16.gmra.mxu0 %v889
  %v925 = vpop.f32.mrf.mxu0
  %v926 = vadd.f32 0.0, %v925
  %v927 = vpop.f32.mrf.mxu0
  %v928 = vpop.f32.mrf.mxu0
  %v929 = vpop.f32.mrf.mxu0
  %930 = vdwg.mxu0
  %v932 = vrot.slane %v926, 6
  %v934 = vadd.f32 %v801, %v932
  %v935 = vxor.u32 %v934, 2147483648
  %v936 = vmul.f32 %v935, 1.442695
  %v937 = vpow.pop %v936
  %v938 = vadd.f32 %v937, 1.0
  %v939 = vrcp.pop %v938
  %v940 = vmul.f32 1.0, %v939
  %v941 = vtanh.pop %v934
  %v943 = vrot.slane %v877, 6
  %v945 = vmul.f32 %v940, %v943
  %947 = vrot.lane.b32.xlu0 %v941, 64
  %v948 = vpop.permute.xlu0 %947
  %v950 = vmul.f32 %v940, %v948
  %952 = vrot.lane.b32.xlu0 %v950, 32
  %v953 = vpop.permute.xlu0 %952
  %v955 = vadd.f32 %v945, %v953
  %v956 = vtanh.pop %v955
  %958 = vrot.lane.b32.xlu0 %v956, 64
  %v959 = vpop.permute.xlu0 %958
  %v961 = vmul.f32 %v940, %v959
  %v962 = vpack.c.bf16 %v961, %v961
  %v964 = vrot.slane %v962, 1
  %965 = vrot.lane.b32.xlu0 %v964, 32
  %v966 = vpop.permute.xlu0 %965
  %v968 = vsel %vm115, %v966, 0
  %970 = vmatprep.subr.bf16.mxu0 0
  %971 = vmatpush1.bf16.msra.mxu0 0
  %972 = vmatprep.subr.bf16.mxu0 0
  %973 = vmatpush1.bf16.msra.mxu0 0
  %974 = vmatprep.subr.bf16.mxu0 0
  %975 = vmatpush1.bf16.msra.mxu0 0
  %976 = vmatprep.subr.bf16.mxu0 0
  %977 = vmatpush1.bf16.msra.mxu0 0
  %978 = vmatprep.subr.bf16.mxu0 0
  %979 = vmatpush1.bf16.msra.mxu0 0
  %980 = vmatprep.subr.bf16.mxu0 0
  %981 = vmatpush1.bf16.msra.mxu0 0
  %982 = vmatprep.subr.bf16.mxu0 0
  %983 = vmatpush1.bf16.msra.mxu0 %v816
  %984 = vmatprep.subr.bf16.mxu0 0
  %985 = vmatpush1.bf16.msra.mxu0 %v815
  %986 = vmatprep.subr.bf16.mxu0 0
  %987 = vmatpush2.bf16.msra.mxu0 0
  %988 = vmatprep.subr.bf16.mxu0 0
  %989 = vmatpush2.bf16.msra.mxu0 0
  %990 = vmatprep.subr.bf16.mxu0 0
  %991 = vmatpush2.bf16.msra.mxu0 0
  %992 = vmatprep.subr.bf16.mxu0 0
  %993 = vmatpush2.bf16.msra.mxu0 0
  %994 = vmatprep.subr.bf16.mxu0 0
  %995 = vmatpush2.bf16.msra.mxu0 0
  %996 = vmatprep.subr.bf16.mxu0 0
  %997 = vmatpush2.bf16.msra.mxu0 0
  %998 = vmatprep.subr.bf16.mxu0 0
  %999 = vmatpush2.bf16.msra.mxu0 0
  %1000 = vmatprep.subr.bf16.mxu0 0
  %1001 = vmatpush2.bf16.msra.mxu0 0
  %1002 = vmatprep.mubr.bf16.mxu0 0
  %1003 = vmatmul.mubr.bf16.gmra.mxu0 %v968
  %v1004 = vpop.f32.mrf.mxu0
  %v1005 = vadd.f32 0.0, %v1004
  %v1006 = vpop.f32.mrf.mxu0
  %v1007 = vpop.f32.mrf.mxu0
  %v1008 = vpop.f32.mrf.mxu0
  %1009 = vdwg.mxu0
  %v1011 = vrot.slane %v1005, 4
  %v1013 = vadd.f32 %v801, %v1011
  %v1014 = vxor.u32 %v1013, 2147483648
  %v1015 = vmul.f32 %v1014, 1.442695
  %v1016 = vpow.pop %v1015
  %v1017 = vadd.f32 %v1016, 1.0
  %v1018 = vrcp.pop %v1017
  %v1019 = vmul.f32 1.0, %v1018
  %v1020 = vtanh.pop %v1013
  %v1022 = vrot.slane %v955, 6
  %v1024 = vmul.f32 %v1019, %v1022
  %1026 = vrot.lane.b32.xlu0 %v1020, 64
  %v1027 = vpop.permute.xlu0 %1026
  %v1029 = vmul.f32 %v1019, %v1027
  %1031 = vrot.lane.b32.xlu0 %v1029, 32
  %v1032 = vpop.permute.xlu0 %1031
  %v1034 = vadd.f32 %v1024, %v1032
  %v1035 = vtanh.pop %v1034
  %1037 = vrot.lane.b32.xlu0 %v1035, 64
  %v1038 = vpop.permute.xlu0 %1037
  %v1040 = vmul.f32 %v1019, %v1038
  %v1041 = vpack.c.bf16 %v1040, %v1040
  %v1043 = vrot.slane %v1041, 2
  %1044 = vrot.lane.b32.xlu0 %v1043, 32
  %v1045 = vpop.permute.xlu0 %1044
  %v1047 = vsel %vm115, %v1045, 0
  %1049 = vmatprep.subr.bf16.mxu0 0
  %1050 = vmatpush1.bf16.msra.mxu0 0
  %1051 = vmatprep.subr.bf16.mxu0 0
  %1052 = vmatpush1.bf16.msra.mxu0 0
  %1053 = vmatprep.subr.bf16.mxu0 0
  %1054 = vmatpush1.bf16.msra.mxu0 0
  %1055 = vmatprep.subr.bf16.mxu0 0
  %1056 = vmatpush1.bf16.msra.mxu0 0
  %1057 = vmatprep.subr.bf16.mxu0 0
  %1058 = vmatpush1.bf16.msra.mxu0 0
  %1059 = vmatprep.subr.bf16.mxu0 0
  %1060 = vmatpush1.bf16.msra.mxu0 0
  %1061 = vmatprep.subr.bf16.mxu0 0
  %1062 = vmatpush1.bf16.msra.mxu0 %v816
  %1063 = vmatprep.subr.bf16.mxu0 0
  %1064 = vmatpush1.bf16.msra.mxu0 %v815
  %1065 = vmatprep.subr.bf16.mxu0 0
  %1066 = vmatpush2.bf16.msra.mxu0 0
  %1067 = vmatprep.subr.bf16.mxu0 0
  %1068 = vmatpush2.bf16.msra.mxu0 0
  %1069 = vmatprep.subr.bf16.mxu0 0
  %1070 = vmatpush2.bf16.msra.mxu0 0
  %1071 = vmatprep.subr.bf16.mxu0 0
  %1072 = vmatpush2.bf16.msra.mxu0 0
  %1073 = vmatprep.subr.bf16.mxu0 0
  %1074 = vmatpush2.bf16.msra.mxu0 0
  %1075 = vmatprep.subr.bf16.mxu0 0
  %1076 = vmatpush2.bf16.msra.mxu0 0
  %1077 = vmatprep.subr.bf16.mxu0 0
  %1078 = vmatpush2.bf16.msra.mxu0 0
  %1079 = vmatprep.subr.bf16.mxu0 0
  %1080 = vmatpush2.bf16.msra.mxu0 0
  %1081 = vmatprep.mubr.bf16.mxu0 0
  %1082 = vmatmul.mubr.bf16.gmra.mxu0 %v1047
  %v1083 = vpop.f32.mrf.mxu0
  %v1084 = vadd.f32 0.0, %v1083
  %v1085 = vpop.f32.mrf.mxu0
  %v1086 = vpop.f32.mrf.mxu0
  %v1087 = vpop.f32.mrf.mxu0
  %1088 = vdwg.mxu0
  %v1090 = vrot.slane %v1084, 2
  %v1092 = vadd.f32 %v801, %v1090
  %v1093 = vxor.u32 %v1092, 2147483648
  %v1094 = vmul.f32 %v1093, 1.442695
  %v1095 = vpow.pop %v1094
  %v1096 = vadd.f32 %v1095, 1.0
  %v1097 = vrcp.pop %v1096
  %v1098 = vmul.f32 1.0, %v1097
  %v1099 = vtanh.pop %v1092
  %v1101 = vrot.slane %v1034, 6
  %v1103 = vmul.f32 %v1098, %v1101
  %1105 = vrot.lane.b32.xlu0 %v1099, 64
  %v1106 = vpop.permute.xlu0 %1105
  %v1108 = vmul.f32 %v1098, %v1106
  %1110 = vrot.lane.b32.xlu0 %v1108, 32
  %v1111 = vpop.permute.xlu0 %1110
  %v1113 = vadd.f32 %v1103, %v1111
  %v1114 = vtanh.pop %v1113
  %1116 = vrot.lane.b32.xlu0 %v1114, 64
  %v1117 = vpop.permute.xlu0 %1116
  %v1119 = vmul.f32 %v1098, %v1117
  %v1120 = vpack.c.bf16 %v1119, %v1119
  %v1122 = vrot.slane %v1120, 3
  %1123 = vrot.lane.b32.xlu0 %v1122, 32
  %v1124 = vpop.permute.xlu0 %1123
  %v1126 = vsel %vm115, %v1124, 0
  %1128 = vmatprep.subr.bf16.mxu0 0
  %1129 = vmatpush1.bf16.msra.mxu0 0
  %1130 = vmatprep.subr.bf16.mxu0 0
  %1131 = vmatpush1.bf16.msra.mxu0 0
  %1132 = vmatprep.subr.bf16.mxu0 0
  %1133 = vmatpush1.bf16.msra.mxu0 0
  %1134 = vmatprep.subr.bf16.mxu0 0
  %1135 = vmatpush1.bf16.msra.mxu0 0
  %1136 = vmatprep.subr.bf16.mxu0 0
  %1137 = vmatpush1.bf16.msra.mxu0 0
  %1138 = vmatprep.subr.bf16.mxu0 0
  %1139 = vmatpush1.bf16.msra.mxu0 0
  %1140 = vmatprep.subr.bf16.mxu0 0
  %1141 = vmatpush1.bf16.msra.mxu0 %v816
  %1142 = vmatprep.subr.bf16.mxu0 0
  %1143 = vmatpush1.bf16.msra.mxu0 %v815
  %1144 = vmatprep.subr.bf16.mxu0 0
  %1145 = vmatpush2.bf16.msra.mxu0 0
  %1146 = vmatprep.subr.bf16.mxu0 0
  %1147 = vmatpush2.bf16.msra.mxu0 0
  %1148 = vmatprep.subr.bf16.mxu0 0
  %1149 = vmatpush2.bf16.msra.mxu0 0
  %1150 = vmatprep.subr.bf16.mxu0 0
  %1151 = vmatpush2.bf16.msra.mxu0 0
  %1152 = vmatprep.subr.bf16.mxu0 0
  %1153 = vmatpush2.bf16.msra.mxu0 0
  %1154 = vmatprep.subr.bf16.mxu0 0
  %1155 = vmatpush2.bf16.msra.mxu0 0
  %1156 = vmatprep.subr.bf16.mxu0 0
  %1157 = vmatpush2.bf16.msra.mxu0 0
  %1158 = vmatprep.subr.bf16.mxu0 0
  %1159 = vmatpush2.bf16.msra.mxu0 0
  %1160 = vmatprep.mubr.bf16.mxu0 0
  %1161 = vmatmul.mubr.bf16.gmra.mxu0 %v1126
  %v1162 = vpop.f32.mrf.mxu0
  %v1163 = vadd.f32 0.0, %v1162
  %v1164 = vpop.f32.mrf.mxu0
  %v1165 = vpop.f32.mrf.mxu0
  %v1166 = vpop.f32.mrf.mxu0
  %1167 = vdwg.mxu0
  %v1168 = vadd.f32 %v804, %v1163
  %v1169 = vxor.u32 %v1168, 2147483648
  %v1170 = vmul.f32 %v1169, 1.442695
  %v1171 = vpow.pop %v1170
  %v1172 = vadd.f32 %v1171, 1.0
  %v1173 = vrcp.pop %v1172
  %v1174 = vmul.f32 1.0, %v1173
  %v1175 = vtanh.pop %v1168
  %v1177 = vrot.slane %v1113, 6
  %v1179 = vmul.f32 %v1174, %v1177
  %1181 = vrot.lane.b32.xlu0 %v1175, 64
  %v1182 = vpop.permute.xlu0 %1181
  %v1184 = vmul.f32 %v1174, %v1182
  %1186 = vrot.lane.b32.xlu0 %v1184, 32
  %v1187 = vpop.permute.xlu0 %1186
  %v1189 = vadd.f32 %v1179, %v1187
  %v1190 = vtanh.pop %v1189
  %1192 = vrot.lane.b32.xlu0 %v1190, 64
  %v1193 = vpop.permute.xlu0 %1192
  %v1195 = vmul.f32 %v1174, %v1193
  %v1196 = vpack.c.bf16 %v1195, %v1195
  %1198 = vrot.lane.b32.xlu0 %v1196, 32
  %v1199 = vpop.permute.xlu0 %1198
  %v1201 = vsel %vm115, %v1199, 0
  %1203 = vmatprep.subr.bf16.mxu0 0
  %1204 = vmatpush1.bf16.msra.mxu0 0
  %1205 = vmatprep.subr.bf16.mxu0 0
  %1206 = vmatpush1.bf16.msra.mxu0 0
  %1207 = vmatprep.subr.bf16.mxu0 0
  %1208 = vmatpush1.bf16.msra.mxu0 0
  %1209 = vmatprep.subr.bf16.mxu0 0
  %1210 = vmatpush1.bf16.msra.mxu0 0
  %1211 = vmatprep.subr.bf16.mxu0 0
  %1212 = vmatpush1.bf16.msra.mxu0 0
  %1213 = vmatprep.subr.bf16.mxu0 0
  %1214 = vmatpush1.bf16.msra.mxu0 0
  %1215 = vmatprep.subr.bf16.mxu0 0
  %1216 = vmatpush1.bf16.msra.mxu0 %v816
  %1217 = vmatprep.subr.bf16.mxu0 0
  %1218 = vmatpush1.bf16.msra.mxu0 %v815
  %1219 = vmatprep.subr.bf16.mxu0 0
  %1220 = vmatpush2.bf16.msra.mxu0 0
  %1221 = vmatprep.subr.bf16.mxu0 0
  %1222 = vmatpush2.bf16.msra.mxu0 0
  %1223 = vmatprep.subr.bf16.mxu0 0
  %1224 = vmatpush2.bf16.msra.mxu0 0
  %1225 = vmatprep.subr.bf16.mxu0 0
  %1226 = vmatpush2.bf16.msra.mxu0 0
  %1227 = vmatprep.subr.bf16.mxu0 0
  %1228 = vmatpush2.bf16.msra.mxu0 0
  %1229 = vmatprep.subr.bf16.mxu0 0
  %1230 = vmatpush2.bf16.msra.mxu0 0
  %1231 = vmatprep.subr.bf16.mxu0 0
  %1232 = vmatpush2.bf16.msra.mxu0 0
  %1233 = vmatprep.subr.bf16.mxu0 0
  %1234 = vmatpush2.bf16.msra.mxu0 0
  %1235 = vmatprep.mubr.bf16.mxu0 0
  %1236 = vmatmul.mubr.bf16.gmra.mxu0 %v1201
  %v1237 = vpop.f32.mrf.mxu0
  %v1238 = vadd.f32 0.0, %v1237
  %v1239 = vpop.f32.mrf.mxu0
  %v1240 = vpop.f32.mrf.mxu0
  %v1241 = vpop.f32.mrf.mxu0
  %1242 = vdwg.mxu0
  %v1244 = vrot.slane %v1238, 6
  %v1246 = vadd.f32 %v804, %v1244
  %v1247 = vxor.u32 %v1246, 2147483648
  %v1248 = vmul.f32 %v1247, 1.442695
  %v1249 = vpow.pop %v1248
  %v1250 = vadd.f32 %v1249, 1.0
  %v1251 = vrcp.pop %v1250
  %v1252 = vmul.f32 1.0, %v1251
  %v1253 = vtanh.pop %v1246
  %v1255 = vrot.slane %v1189, 6
  %v1257 = vmul.f32 %v1252, %v1255
  %1259 = vrot.lane.b32.xlu0 %v1253, 64
  %v1260 = vpop.permute.xlu0 %1259
  %v1262 = vmul.f32 %v1252, %v1260
  %1264 = vrot.lane.b32.xlu0 %v1262, 32
  %v1265 = vpop.permute.xlu0 %1264
  %v1267 = vadd.f32 %v1257, %v1265
  %v1268 = vtanh.pop %v1267
  %1270 = vrot.lane.b32.xlu0 %v1268, 64
  %v1271 = vpop.permute.xlu0 %1270
  %v1273 = vmul.f32 %v1252, %v1271
  %v1274 = vpack.c.bf16 %v1273, %v1273
  %v1276 = vrot.slane %v1274, 1
  %1277 = vrot.lane.b32.xlu0 %v1276, 32
  %v1278 = vpop.permute.xlu0 %1277
  %v1280 = vsel %vm115, %v1278, 0
  %1282 = vmatprep.subr.bf16.mxu0 0
  %1283 = vmatpush1.bf16.msra.mxu0 0
  %1284 = vmatprep.subr.bf16.mxu0 0
  %1285 = vmatpush1.bf16.msra.mxu0 0
  %1286 = vmatprep.subr.bf16.mxu0 0
  %1287 = vmatpush1.bf16.msra.mxu0 0
  %1288 = vmatprep.subr.bf16.mxu0 0
  %1289 = vmatpush1.bf16.msra.mxu0 0
  %1290 = vmatprep.subr.bf16.mxu0 0
  %1291 = vmatpush1.bf16.msra.mxu0 0
  %1292 = vmatprep.subr.bf16.mxu0 0
  %1293 = vmatpush1.bf16.msra.mxu0 0
  %1294 = vmatprep.subr.bf16.mxu0 0
  %1295 = vmatpush1.bf16.msra.mxu0 %v816
  %1296 = vmatprep.subr.bf16.mxu0 0
  %1297 = vmatpush1.bf16.msra.mxu0 %v815
  %1298 = vmatprep.subr.bf16.mxu0 0
  %1299 = vmatpush2.bf16.msra.mxu0 0
  %1300 = vmatprep.subr.bf16.mxu0 0
  %1301 = vmatpush2.bf16.msra.mxu0 0
  %1302 = vmatprep.subr.bf16.mxu0 0
  %1303 = vmatpush2.bf16.msra.mxu0 0
  %1304 = vmatprep.subr.bf16.mxu0 0
  %1305 = vmatpush2.bf16.msra.mxu0 0
  %1306 = vmatprep.subr.bf16.mxu0 0
  %1307 = vmatpush2.bf16.msra.mxu0 0
  %1308 = vmatprep.subr.bf16.mxu0 0
  %1309 = vmatpush2.bf16.msra.mxu0 0
  %1310 = vmatprep.subr.bf16.mxu0 0
  %1311 = vmatpush2.bf16.msra.mxu0 0
  %1312 = vmatprep.subr.bf16.mxu0 0
  %1313 = vmatpush2.bf16.msra.mxu0 0
  %1314 = vmatprep.mubr.bf16.mxu0 0
  %1315 = vmatmul.mubr.bf16.gmra.mxu0 %v1280
  %v1316 = vpop.f32.mrf.mxu0
  %v1317 = vadd.f32 0.0, %v1316
  %v1318 = vpop.f32.mrf.mxu0
  %v1319 = vpop.f32.mrf.mxu0
  %v1320 = vpop.f32.mrf.mxu0
  %1321 = vdwg.mxu0
  %v1323 = vrot.slane %v1317, 4
  %v1325 = vadd.f32 %v804, %v1323
  %v1326 = vxor.u32 %v1325, 2147483648
  %v1327 = vmul.f32 %v1326, 1.442695
  %v1328 = vpow.pop %v1327
  %v1329 = vadd.f32 %v1328, 1.0
  %v1330 = vrcp.pop %v1329
  %v1331 = vmul.f32 1.0, %v1330
  %v1332 = vtanh.pop %v1325
  %v1334 = vrot.slane %v1267, 6
  %v1336 = vmul.f32 %v1331, %v1334
  %1338 = vrot.lane.b32.xlu0 %v1332, 64
  %v1339 = vpop.permute.xlu0 %1338
  %v1341 = vmul.f32 %v1331, %v1339
  %1343 = vrot.lane.b32.xlu0 %v1341, 32
  %v1344 = vpop.permute.xlu0 %1343
  %v1346 = vadd.f32 %v1336, %v1344
  %v1347 = vtanh.pop %v1346
  %1349 = vrot.lane.b32.xlu0 %v1347, 64
  %v1350 = vpop.permute.xlu0 %1349
  %v1352 = vmul.f32 %v1331, %v1350
  %v1353 = vpack.c.bf16 %v1352, %v1352
  %v1355 = vrot.slane %v1353, 2
  %1356 = vrot.lane.b32.xlu0 %v1355, 32
  %v1357 = vpop.permute.xlu0 %1356
  %v1359 = vsel %vm115, %v1357, 0
  %1361 = vmatprep.subr.bf16.mxu0 0
  %1362 = vmatpush1.bf16.msra.mxu0 0
  %1363 = vmatprep.subr.bf16.mxu0 0
  %1364 = vmatpush1.bf16.msra.mxu0 0
  %1365 = vmatprep.subr.bf16.mxu0 0
  %1366 = vmatpush1.bf16.msra.mxu0 0
  %1367 = vmatprep.subr.bf16.mxu0 0
  %1368 = vmatpush1.bf16.msra.mxu0 0
  %1369 = vmatprep.subr.bf16.mxu0 0
  %1370 = vmatpush1.bf16.msra.mxu0 0
  %1371 = vmatprep.subr.bf16.mxu0 0
  %1372 = vmatpush1.bf16.msra.mxu0 0
  %1373 = vmatprep.subr.bf16.mxu0 0
  %1374 = vmatpush1.bf16.msra.mxu0 %v816
  %1375 = vmatprep.subr.bf16.mxu0 0
  %1376 = vmatpush1.bf16.msra.mxu0 %v815
  %1377 = vmatprep.subr.bf16.mxu0 0
  %1378 = vmatpush2.bf16.msra.mxu0 0
  %1379 = vmatprep.subr.bf16.mxu0 0
  %1380 = vmatpush2.bf16.msra.mxu0 0
  %1381 = vmatprep.subr.bf16.mxu0 0
  %1382 = vmatpush2.bf16.msra.mxu0 0
  %1383 = vmatprep.subr.bf16.mxu0 0
  %1384 = vmatpush2.bf16.msra.mxu0 0
  %1385 = vmatprep.subr.bf16.mxu0 0
  %1386 = vmatpush2.bf16.msra.mxu0 0
  %1387 = vmatprep.subr.bf16.mxu0 0
  %1388 = vmatpush2.bf16.msra.mxu0 0
  %1389 = vmatprep.subr.bf16.mxu0 0
  %1390 = vmatpush2.bf16.msra.mxu0 0
  %1391 = vmatprep.subr.bf16.mxu0 0
  %1392 = vmatpush2.bf16.msra.mxu0 0
  %1393 = vmatprep.mubr.bf16.mxu0 0
  %1394 = vmatmul.mubr.bf16.gmra.mxu0 %v1359
  %v1395 = vpop.f32.mrf.mxu0
  %v1396 = vadd.f32 0.0, %v1395
  %v1397 = vpop.f32.mrf.mxu0
  %v1398 = vpop.f32.mrf.mxu0
  %v1399 = vpop.f32.mrf.mxu0
  %1400 = vdwg.mxu0
  %v1402 = vrot.slane %v1396, 2
  %v1404 = vadd.f32 %v804, %v1402
  %v1405 = vxor.u32 %v1404, 2147483648
  %v1406 = vmul.f32 %v1405, 1.442695
  %v1407 = vpow.pop %v1406
  %v1408 = vadd.f32 %v1407, 1.0
  %v1409 = vrcp.pop %v1408
  %v1410 = vmul.f32 1.0, %v1409
  %v1411 = vtanh.pop %v1404
  %v1413 = vrot.slane %v1346, 6
  %v1415 = vmul.f32 %v1410, %v1413
  %1417 = vrot.lane.b32.xlu0 %v1411, 64
  %v1418 = vpop.permute.xlu0 %1417
  %v1420 = vmul.f32 %v1410, %v1418
  %1422 = vrot.lane.b32.xlu0 %v1420, 32
  %v1423 = vpop.permute.xlu0 %1422
  %v1425 = vadd.f32 %v1415, %v1423
  %v1426 = vtanh.pop %v1425
  %1428 = vrot.lane.b32.xlu0 %v1426, 64
  %v1429 = vpop.permute.xlu0 %1428
  %v1431 = vmul.f32 %v1410, %v1429
  %1433 = vrot.lane.b32.xlu0 %v883, 32
  %v1434 = vpop.permute.xlu0 %1433
  %v1437 = vrot.slane %v961, 2
  %1438 = vrot.lane.b32.xlu0 %v1437, 64
  %v1439 = vpop.permute.xlu0 %1438
  %v1442 = vrot.slane %v1040, 4
  %1443 = vrot.lane.b32.xlu0 %v1442, 96
  %v1444 = vpop.permute.xlu0 %1443
  %v1447 = vrot.slane %v1119, 6
  %1450 = vrot.lane.b32.xlu0 %v1195, 32
  %v1451 = vpop.permute.xlu0 %1450
  %v1454 = vrot.slane %v1273, 2
  %1455 = vrot.lane.b32.xlu0 %v1454, 64
  %v1456 = vpop.permute.xlu0 %1455
  %v1459 = vrot.slane %v1352, 4
  %1460 = vrot.lane.b32.xlu0 %v1459, 96
  %v1461 = vpop.permute.xlu0 %1460
  %v1464 = vrot.slane %v1431, 6
  %v1466 = vsel %vm115, %v1434, %v1439
  %vm1467 = vcmask 523264
  %v1468 = vsel %vm1467, %v1466, %v1444
  %vm1469 = vcmask 785408
  %v1470 = vsel %vm1469, %v1468, %v1447
  %v1471 = vsel %vm115, %v1451, %v1456
  %v1472 = vsel %vm1467, %v1471, %v1461
  %v1473 = vsel %vm1469, %v1472, %v1464
  %v1476 = vcombine.low %v1470, %v1473
  %v1478 = vunpack.c.l.s4 1983009808
  %v1479 = vunpack.c.0.s8 %v1478
  %v1480 = vlaneseq
  %v1481 = vshrl.u32 %v1480, 7
  %v1482 = vsub.s32 %v1479, %v1481
  %v1483 = vrot.slane %v1476, %v1482
  %1485 = vst [vmem:[%s7] sm:$0xf] %v1483
  // Predicated region
  $region30: #{basic_rnn_forward.1} parent=0 // pred_check
    _
  $region31: #{basic_rnn_forward.1} parent=0 // pred_check_branch
    %1487 = sbr.rel (0) target = $region33
  $region32: #{basic_rnn_forward.1} parent=0 // pred_region
    _
  $region33: #{basic_rnn_forward.1} parent=0 // pred_fallthru
    _
  // Predicated region
  $region34: #{basic_rnn_forward.1} parent=0 // pred_check
    _
  $region35: #{basic_rnn_forward.1} parent=0 // pred_check_branch
    %1489 = sbr.rel (0) target = $region37
  $region36: #{basic_rnn_forward.1} parent=0 // pred_region
    _
  $region37: #{basic_rnn_forward.1} parent=0 // pred_fallthru
    _

</llo_original>
